<compile_context>
chip_gen: v5e
topology: v5e:2x2
jax: 0.10.0
libtpu: 0.0.40
codegen_flags: <defaults>
</compile_context>

<pallas_src>
import jax
import jax.numpy as jnp
from jax import lax
from jax.experimental import pallas as pl
from jax.experimental.pallas import tpu as pltpu

# ----------------------------- configuration --------------------------------
INPUT_DIM = 16            # per-step feature size fed to the LSTM backbone
SEQ_LEN = 8
BATCH = 2
LSTM_OUTPUT_DIM = 38      # LSTM_output_dim in the module
HEAD_HIDDEN_DIM = 128     # head_hidden_dim in the module
ACTION_SPACE = 6          # Env.action_space (undefined in the snippet; fixed here)

# padded / fused sizes (all (8,128)-tile aligned)
B_PAD = 8                 # batch tile = one sublane group
H_PAD = 128               # LSTM hidden padded 38 -> 128 (one lane group)
GATES_PAD = 4 * H_PAD     # 512: gate k lives at lanes [k*128, k*128+38)
HEAD1_OUT = 2 * HEAD_HIDDEN_DIM   # 256: [adv hidden | val hidden]
OUT_PAD = 128             # q output lanes: adv in 0..5, val in 6, rest 0


def _sigmoid(x):
    # tanh form: one EUP tanh + a VPU fma — no divide on the serial per-step chain
    return 0.5 * (jnp.tanh(0.5 * x) + 1.0)


# --------------------------- fused Pallas kernel -----------------------------
def duel_ddnq_kernel(x_ref, w_ih_ref, w_hh_ref, b_lstm_ref,
                     w1_ref, b1_ref, w2_ref, b2_ref,
                     q_ref, xp_ref):
    """One kernel per batch-tile: LSTM input projection (1 matmul) -> 8-step
    recurrence (h/c in vregs) -> fused dueling head (2 lane-dense matmuls).
    All dots are bf16 x bf16 -> f32 accumulate (single MXU pass)."""
    # ---- input projection for ALL timesteps in one MXU pass -----------------
    xp_ref[...] = (jnp.dot(x_ref[...].astype(jnp.bfloat16), w_ih_ref[...],
                           preferred_element_type=jnp.float32)
                   + b_lstm_ref[...])                       # (T*B_PAD, 4*H_PAD) f32

    def lstm_step(t, carry):
        h, c = carry
        row0 = pl.multiple_of(t * B_PAD, B_PAD)
        # w_hh streamed from VMEM each step (no 256 KiB vreg-resident hoist)
        gates = xp_ref[pl.ds(row0, B_PAD), :] + jnp.dot(
            h.astype(jnp.bfloat16), w_hh_ref[...],
            preferred_element_type=jnp.float32)             # (B_PAD, 4*H_PAD)
        i_g = _sigmoid(gates[:, 0 * H_PAD:1 * H_PAD])
        f_g = _sigmoid(gates[:, 1 * H_PAD:2 * H_PAD])
        g_g = jnp.tanh(gates[:, 2 * H_PAD:3 * H_PAD])
        o_g = _sigmoid(gates[:, 3 * H_PAD:4 * H_PAD])
        c_new = f_g * c + i_g * g_g
        h_new = o_g * jnp.tanh(c_new)
        # padded lanes stay exactly 0: gates there are 0 -> i=f=o=0.5, g=0
        return h_new, c_new

    h0 = jnp.zeros((B_PAD, H_PAD), jnp.float32)
    c0 = jnp.zeros((B_PAD, H_PAD), jnp.float32)
    h_last, _ = lax.fori_loop(0, SEQ_LEN, lstm_step, (h0, c0), unroll=True)

    # ---- dueling head: fused adv/val first layer (one 256-wide matmul) -------
    h1 = jnp.dot(h_last.astype(jnp.bfloat16), w1_ref[...],
                 preferred_element_type=jnp.float32) + b1_ref[...]   # (B_PAD, 256)
    h1 = jnp.maximum(h1, 0.0)                                        # ReLU

    # fused second layer: block-diagonal (256, 128) RHS, lane-dense output
    out2 = jnp.dot(h1.astype(jnp.bfloat16), w2_ref[...],
                   preferred_element_type=jnp.float32) + b2_ref[...]  # (B_PAD, 128)

    lane = lax.broadcasted_iota(jnp.int32, (B_PAD, OUT_PAD), 1)
    adv_mask = lane < ACTION_SPACE                 # cols 0..5  = advantage
    val_mask = lane == ACTION_SPACE                # col  6     = value
    adv = jnp.where(adv_mask, out2, 0.0)
    adv_mean = jnp.sum(adv, axis=1, keepdims=True) * (1.0 / ACTION_SPACE)
    val = jnp.sum(jnp.where(val_mask, out2, 0.0), axis=1, keepdims=True)
    # q = val + adv - mean(adv); lane-dense unmasked (8,128) store
    q_ref[...] = jnp.where(adv_mask, out2 + val - adv_mean, 0.0)


def _cost_estimate(n_tiles):
    flops = 2 * n_tiles * (
        SEQ_LEN * B_PAD * INPUT_DIM * GATES_PAD       # input proj
        + SEQ_LEN * B_PAD * H_PAD * GATES_PAD         # recurrence
        + B_PAD * H_PAD * HEAD1_OUT                   # head layer 1
        + B_PAD * HEAD1_OUT * OUT_PAD)                # head layer 2
    transcendentals = n_tiles * SEQ_LEN * B_PAD * 5 * H_PAD   # 3 sigmoid + 2 tanh
    weight_bytes = 2 * (INPUT_DIM * GATES_PAD + H_PAD * GATES_PAD
                        + H_PAD * HEAD1_OUT + HEAD1_OUT * OUT_PAD)   # bf16
    bias_bytes = 4 * (GATES_PAD + HEAD1_OUT + OUT_PAD)
    io_bytes = n_tiles * 4 * (SEQ_LEN * B_PAD * INPUT_DIM + B_PAD * OUT_PAD)
    return pl.CostEstimate(flops=flops, transcendentals=transcendentals,
                           bytes_accessed=weight_bytes + bias_bytes + io_bytes)


@jax.jit
def duel_ddnq_forward(x, packed):
    """x: (B, T, F) float32 -> q_values (B, ACTION_SPACE)."""
    B, T, F = x.shape
    n_tiles = pl.cdiv(B, B_PAD)
    b_full = n_tiles * B_PAD
    # wrapper-side layout plumbing: time-major within each batch-tile of 8
    # sublanes, flattened so the kernel's input projection is a single matmul.
    xt = jnp.swapaxes(x, 0, 1)                                    # (T, B, F)
    xt = jnp.pad(xt, ((0, 0), (0, b_full - B), (0, 0)))           # (T, b_full, F)
    xt = xt.reshape(T, n_tiles, B_PAD, F)
    xt = jnp.transpose(xt, (1, 0, 2, 3))                          # (tiles, T, 8, F)
    x_tiles = xt.reshape(n_tiles, T * B_PAD, F).astype(jnp.float32)

    args = (x_tiles, packed["w_ih"], packed["w_hh"], packed["b_lstm"],
            packed["w1"], packed["b1"], packed["w2"], packed["b2"])

    in_specs = [
        # per-tile input block; leading batch-tile dim squeezed out
        pl.BlockSpec((None, SEQ_LEN * B_PAD, INPUT_DIM), lambda i: (i, 0, 0)),
        # weights/biases: constant index_map -> stay VMEM-resident across tiles
        pl.BlockSpec((INPUT_DIM, GATES_PAD), lambda i: (0, 0)),
        pl.BlockSpec((H_PAD, GATES_PAD), lambda i: (0, 0)),
        pl.BlockSpec((1, GATES_PAD), lambda i: (0, 0)),
        pl.BlockSpec((H_PAD, HEAD1_OUT), lambda i: (0, 0)),
        pl.BlockSpec((1, HEAD1_OUT), lambda i: (0, 0)),
        pl.BlockSpec((HEAD1_OUT, OUT_PAD), lambda i: (0, 0)),
        pl.BlockSpec((1, OUT_PAD), lambda i: (0, 0)),
    ]
    out_specs = pl.BlockSpec((None, B_PAD, OUT_PAD), lambda i: (i, 0, 0))

    q_pad = pl.pallas_call(
        duel_ddnq_kernel,
        grid=(n_tiles,),
        in_specs=in_specs,
        out_specs=out_specs,
        out_shape=jax.ShapeDtypeStruct((n_tiles, B_PAD, OUT_PAD), jnp.float32),
        scratch_shapes=[pltpu.VMEM((SEQ_LEN * B_PAD, GATES_PAD), jnp.float32)],
        compiler_params=pltpu.CompilerParams(dimension_semantics=("parallel",)),
        cost_estimate=_cost_estimate(n_tiles),
    )(*args)
    # slice the real batch rows and the 6 real action lanes
    return q_pad.reshape(n_tiles * B_PAD, OUT_PAD)[:B, :ACTION_SPACE]


# ------------------------------ parameter init -------------------------------
def init_params(key):
    ks = jax.random.split(key, 12)

    def dense(kw, kb, fan_in, fan_out):
        bound = 1.0 / jnp.sqrt(fan_in)
        w = jax.random.uniform(kw, (fan_in, fan_out), jnp.float32, -bound, bound)
        b = jax.random.uniform(kb, (1, fan_out), jnp.float32, -bound, bound)
        return w, b

    p = {}
    p["w_adv_fc"], p["b_adv_fc"] = dense(ks[0], ks[1], LSTM_OUTPUT_DIM, HEAD_HIDDEN_DIM)
    p["w_adv_out"], p["b_adv_out"] = dense(ks[2], ks[3], HEAD_HIDDEN_DIM, ACTION_SPACE)
    p["w_val_fc"], p["b_val_fc"] = dense(ks[4], ks[5], LSTM_OUTPUT_DIM, HEAD_HIDDEN_DIM)
    p["w_val_out"], p["b_val_out"] = dense(ks[6], ks[7], HEAD_HIDDEN_DIM, 1)

    bound = 1.0 / jnp.sqrt(LSTM_OUTPUT_DIM)
    lstm = {
        "w_ih": jax.random.uniform(ks[8], (INPUT_DIM, 4 * LSTM_OUTPUT_DIM),
                                   jnp.float32, -bound, bound),
        "w_hh": jax.random.uniform(ks[9], (LSTM_OUTPUT_DIM, 4 * LSTM_OUTPUT_DIM),
                                   jnp.float32, -bound, bound),
        "b": jax.random.uniform(ks[10], (4 * LSTM_OUTPUT_DIM,),
                                jnp.float32, -bound, bound),
    }
    return p, lstm


def pack_params(head, lstm):
    """Pad/fuse raw params into the (8,128)-aligned layout the kernel expects.
    Weights are stored bf16 (single-pass MXU); biases stay f32 (added post-dot)."""
    H, Hp = LSTM_OUTPUT_DIM, H_PAD

    def pad_gate_cols(w):
        # each of the 4 H-wide gate blocks is placed at a 128-lane stride
        parts = jnp.split(w, 4, axis=-1)
        parts = [jnp.pad(p, [(0, 0)] * (p.ndim - 1) + [(0, Hp - H)]) for p in parts]
        return jnp.concatenate(parts, axis=-1)

    w_ih_p = pad_gate_cols(lstm["w_ih"])                                  # (F, 512)
    w_hh_p = jnp.pad(pad_gate_cols(lstm["w_hh"]), ((0, Hp - H), (0, 0)))  # (128, 512)
    b_lstm = pad_gate_cols(lstm["b"][None, :])                            # (1, 512)

    # head layer 1: [adv_fc | val_fc], K padded 38 -> 128 (zero rows)
    w1 = jnp.concatenate([head["w_adv_fc"], head["w_val_fc"]], axis=1)    # (38, 256)
    w1 = jnp.pad(w1, ((0, Hp - H), (0, 0)))                               # (128, 256)
    b1 = jnp.concatenate([head["b_adv_fc"], head["b_val_fc"]], axis=1)    # (1, 256)

    # head layer 2: block-diagonal lane-dense RHS (adv -> cols 0..5, val -> col 6)
    w2 = jnp.zeros((HEAD1_OUT, OUT_PAD), jnp.float32)
    w2 = w2.at[:HEAD_HIDDEN_DIM, :ACTION_SPACE].set(head["w_adv_out"])
    w2 = w2.at[HEAD_HIDDEN_DIM:, ACTION_SPACE:ACTION_SPACE + 1].set(head["w_val_out"])
    b2 = jnp.zeros((1, OUT_PAD), jnp.float32)
    b2 = b2.at[0, :ACTION_SPACE].set(head["b_adv_out"][0])
    b2 = b2.at[0, ACTION_SPACE].set(head["b_val_out"][0, 0])

    bf = jnp.bfloat16
    return {"w_ih": w_ih_p.astype(bf), "w_hh": w_hh_p.astype(bf),
            "b_lstm": b_lstm.astype(jnp.float32),
            "w1": w1.astype(bf), "b1": b1.astype(jnp.float32),
            "w2": w2.astype(bf), "b2": b2.astype(jnp.float32)}


# --------------------------- pure-JAX reference -------------------------------
def lstm_forward_ref(x, lstm):
    w_ih, w_hh, b = lstm["w_ih"], lstm["w_hh"], lstm["b"]
    B = x.shape[0]
    H = w_hh.shape[0]

    def step(carry, x_t):
        h, c = carry
        gates = x_t @ w_ih + h @ w_hh + b
        i, f, g, o = jnp.split(gates, 4, axis=-1)
        i = jax.nn.sigmoid(i); f = jax.nn.sigmoid(f)
        g = jnp.tanh(g); o = jax.nn.sigmoid(o)
        c = f * c + i * g
        h = o * jnp.tanh(c)
        return (h, c), None

    h0 = jnp.zeros((B, H), jnp.float32)
    c0 = jnp.zeros((B, H), jnp.float32)
    (h_last, _), _ = lax.scan(step, (h0, c0), jnp.swapaxes(x, 0, 1))
    return h_last


def head_ref(shared_out, p):
    h_adv = jnp.maximum(shared_out @ p["w_adv_fc"] + p["b_adv_fc"], 0.0)
    adv = h_adv @ p["w_adv_out"] + p["b_adv_out"]
    h_val = jnp.maximum(shared_out @ p["w_val_fc"] + p["b_val_fc"], 0.0)
    val = h_val @ p["w_val_out"] + p["b_val_out"]
    return val + adv - jnp.mean(adv, axis=1, keepdims=True)


if __name__ == "__main__":
    key = jax.random.PRNGKey(0)
    k_x, k_p = jax.random.split(key)
    x = jax.random.normal(k_x, (BATCH, SEQ_LEN, INPUT_DIM), jnp.float32)
    head_params, lstm_params = init_params(k_p)
    packed = pack_params(head_params, lstm_params)

    q = duel_ddnq_forward(x, packed)
    q = jax.block_until_ready(q)

    # correctness check against a pure-JAX reference of the full forward.
    # Both kernel and reference run at TPU default matmul precision
    # (bf16 multiply / f32 accumulate); 2e-3 leaves margin for the 8-step
    # recurrence's accumulated bf16 rounding differences.
    shared = lstm_forward_ref(x, lstm_params)
    q_ref = head_ref(shared, head_params)
    assert q.shape == (BATCH, ACTION_SPACE)
    assert jnp.allclose(q, q_ref, atol=2e-3, rtol=2e-3), (q, q_ref)

    print("KERNEL_OK")
</pallas_src>

<mosaic_0001>
module attributes {stable_mosaic.version = 11 : i64} {
  func.func @duel_ddnq_kernel(%arg0: i32, %arg1: memref<1x64x16xf32, #tpu.memory_space<vmem>>, %arg2: memref<16x512xbf16, #tpu.memory_space<vmem>>, %arg3: memref<128x512xbf16, #tpu.memory_space<vmem>>, %arg4: memref<1x512xf32, #tpu.memory_space<vmem>>, %arg5: memref<128x256xbf16, #tpu.memory_space<vmem>>, %arg6: memref<1x256xf32, #tpu.memory_space<vmem>>, %arg7: memref<256x128xbf16, #tpu.memory_space<vmem>>, %arg8: memref<1x128xf32, #tpu.memory_space<vmem>>, %arg9: memref<1x8x128xf32, #tpu.memory_space<vmem>>, %arg10: memref<64x512xf32, #tpu.memory_space<vmem>>) attributes {dimension_semantics = [#tpu.dimension_semantics<parallel>], iteration_bounds = array<i64: 1>, scalar_prefetch = 0 : i64, scratch_operands = 1 : i64, tpu.core_type = #tpu.core_type<tc>, window_params = [{transform_indices = @transform_0, window_bounds = array<i64: 1, 64, 16>}, {pipeline_mode = #tpu.pipeline_mode<synchronous>, transform_indices = @transform_1, window_bounds = array<i64: 16, 512>}, {pipeline_mode = #tpu.pipeline_mode<synchronous>, transform_indices = @transform_2, window_bounds = array<i64: 128, 512>}, {pipeline_mode = #tpu.pipeline_mode<synchronous>, transform_indices = @transform_3, window_bounds = array<i64: 1, 512>}, {pipeline_mode = #tpu.pipeline_mode<synchronous>, transform_indices = @transform_4, window_bounds = array<i64: 128, 256>}, {pipeline_mode = #tpu.pipeline_mode<synchronous>, transform_indices = @transform_5, window_bounds = array<i64: 1, 256>}, {pipeline_mode = #tpu.pipeline_mode<synchronous>, transform_indices = @transform_6, window_bounds = array<i64: 256, 128>}, {pipeline_mode = #tpu.pipeline_mode<synchronous>, transform_indices = @transform_7, window_bounds = array<i64: 1, 128>}, {transform_indices = @transform_8, window_bounds = array<i64: 1, 8, 128>}]} {
    %c0 = arith.constant 0 : index
    %c0_0 = arith.constant 0 : index
    %c0_1 = arith.constant 0 : index
    %0 = vector.load %arg1[%c0, %c0_0, %c0_1] : memref<1x64x16xf32, #tpu.memory_space<vmem>>, vector<1x64x16xf32>
    %1 = vector.shape_cast %0 : vector<1x64x16xf32> to vector<64x16xf32>
    %2 = arith.truncf %1 : vector<64x16xf32> to vector<64x16xbf16>
    %c0_2 = arith.constant 0 : index
    %c0_3 = arith.constant 0 : index
    %3 = vector.load %arg2[%c0_2, %c0_3] : memref<16x512xbf16, #tpu.memory_space<vmem>>, vector<16x512xbf16>
    %cst = arith.constant dense<0.000000e+00> : vector<64x512xf32>
    %4 = tpu.matmul %2, %3, %cst {dimension_numbers = #tpu.dot_dimension_numbers<[1], [0], [0], [1], [0, 0, 1, 1], [], []>} : vector<64x16xbf16>, vector<16x512xbf16>, vector<64x512xf32> -> vector<64x512xf32>
    %c0_4 = arith.constant 0 : index
    %c0_5 = arith.constant 0 : index
    %5 = vector.load %arg4[%c0_4, %c0_5] : memref<1x512xf32, #tpu.memory_space<vmem>>, vector<1x512xf32>
    %6 = vector.broadcast %5 : vector<1x512xf32> to vector<64x512xf32>
    %7 = arith.addf %4, %6 : vector<64x512xf32>
    %c0_6 = arith.constant 0 : index
    %c0_7 = arith.constant 0 : index
    %8 = vector.load %arg10[%c0_6, %c0_7] : memref<64x512xf32, #tpu.memory_space<vmem>>, vector<64x512xf32>
    tpu.vector_store %arg10[%c0_6, %c0_7], %7 {strides = array<i32>} : memref<64x512xf32, #tpu.memory_space<vmem>>, vector<64x512xf32>,
    %cst_8 = arith.constant 0.000000e+00 : f32
    %9 = vector.broadcast %cst_8 : f32 to vector<8x128xf32>
    %cst_9 = arith.constant 0.000000e+00 : f32
    %10 = vector.broadcast %cst_9 : f32 to vector<8x128xf32>
    %c0_i32 = arith.constant 0 : i32
    %c8_i32 = arith.constant 8 : i32
    %11 = arith.muli %c0_i32, %c8_i32 : i32
    %12 = tpu.assume_multiple %11, 8 : i32
    %13 = arith.index_cast %12 : i32 to index
    %c0_10 = arith.constant 0 : index
    %14 = vector.load %arg10[%13, %c0_10] : memref<64x512xf32, #tpu.memory_space<vmem>>, vector<8x512xf32>
    %15 = arith.truncf %9 : vector<8x128xf32> to vector<8x128xbf16>
    %c0_11 = arith.constant 0 : index
    %c0_12 = arith.constant 0 : index
    %16 = vector.load %arg3[%c0_11, %c0_12] : memref<128x512xbf16, #tpu.memory_space<vmem>>, vector<128x512xbf16>
    %cst_13 = arith.constant dense<0.000000e+00> : vector<8x512xf32>
    %17 = tpu.matmul %15, %16, %cst_13 {dimension_numbers = #tpu.dot_dimension_numbers<[1], [0], [0], [1], [0, 0, 1, 1], [], []>} : vector<8x128xbf16>, vector<128x512xbf16>, vector<8x512xf32> -> vector<8x512xf32>
    %18 = arith.addf %14, %17 : vector<8x512xf32>
    %19 = vector.extract_strided_slice %18 {offsets = [0, 0], sizes = [8, 128], strides = [1, 1]} : vector<8x512xf32> to vector<8x128xf32>
    %cst_14 = arith.constant 5.000000e-01 : f32
    %20 = vector.broadcast %cst_14 : f32 to vector<8x128xf32>
    %21 = arith.mulf %20, %19 : vector<8x128xf32>
    %22 = math.tanh %21 : vector<8x128xf32>
    %cst_15 = arith.constant 1.000000e+00 : f32
    %23 = vector.broadcast %cst_15 : f32 to vector<8x128xf32>
    %24 = arith.addf %22, %23 : vector<8x128xf32>
    %cst_16 = arith.constant 5.000000e-01 : f32
    %25 = vector.broadcast %cst_16 : f32 to vector<8x128xf32>
    %26 = arith.mulf %25, %24 : vector<8x128xf32>
    %27 = vector.extract_strided_slice %18 {offsets = [0, 128], sizes = [8, 128], strides = [1, 1]} : vector<8x512xf32> to vector<8x128xf32>
    %cst_17 = arith.constant 5.000000e-01 : f32
    %28 = vector.broadcast %cst_17 : f32 to vector<8x128xf32>
    %29 = arith.mulf %28, %27 : vector<8x128xf32>
    %30 = math.tanh %29 : vector<8x128xf32>
    %cst_18 = arith.constant 1.000000e+00 : f32
    %31 = vector.broadcast %cst_18 : f32 to vector<8x128xf32>
    %32 = arith.addf %30, %31 : vector<8x128xf32>
    %cst_19 = arith.constant 5.000000e-01 : f32
    %33 = vector.broadcast %cst_19 : f32 to vector<8x128xf32>
    %34 = arith.mulf %33, %32 : vector<8x128xf32>
    %35 = vector.extract_strided_slice %18 {offsets = [0, 256], sizes = [8, 128], strides = [1, 1]} : vector<8x512xf32> to vector<8x128xf32>
    %36 = math.tanh %35 : vector<8x128xf32>
    %37 = vector.extract_strided_slice %18 {offsets = [0, 384], sizes = [8, 128], strides = [1, 1]} : vector<8x512xf32> to vector<8x128xf32>
    %cst_20 = arith.constant 5.000000e-01 : f32
    %38 = vector.broadcast %cst_20 : f32 to vector<8x128xf32>
    %39 = arith.mulf %38, %37 : vector<8x128xf32>
    %40 = math.tanh %39 : vector<8x128xf32>
    %cst_21 = arith.constant 1.000000e+00 : f32
    %41 = vector.broadcast %cst_21 : f32 to vector<8x128xf32>
    %42 = arith.addf %40, %41 : vector<8x128xf32>
    %cst_22 = arith.constant 5.000000e-01 : f32
    %43 = vector.broadcast %cst_22 : f32 to vector<8x128xf32>
    %44 = arith.mulf %43, %42 : vector<8x128xf32>
    %45 = arith.mulf %34, %10 : vector<8x128xf32>
    %46 = arith.mulf %26, %36 : vector<8x128xf32>
    %47 = arith.addf %45, %46 : vector<8x128xf32>
    %48 = math.tanh %47 : vector<8x128xf32>
    %49 = arith.mulf %44, %48 : vector<8x128xf32>
    %c1_i32 = arith.constant 1 : i32
    %c8_i32_23 = arith.constant 8 : i32
    %50 = arith.muli %c1_i32, %c8_i32_23 : i32
    %51 = tpu.assume_multiple %50, 8 : i32
    %52 = arith.index_cast %51 : i32 to index
    %c0_24 = arith.constant 0 : index
    %53 = vector.load %arg10[%52, %c0_24] : memref<64x512xf32, #tpu.memory_space<vmem>>, vector<8x512xf32>
    %54 = arith.truncf %49 : vector<8x128xf32> to vector<8x128xbf16>
    %c0_25 = arith.constant 0 : index
    %c0_26 = arith.constant 0 : index
    %55 = vector.load %arg3[%c0_25, %c0_26] : memref<128x512xbf16, #tpu.memory_space<vmem>>, vector<128x512xbf16>
    %cst_27 = arith.constant dense<0.000000e+00> : vector<8x512xf32>
    %56 = tpu.matmul %54, %55, %cst_27 {dimension_numbers = #tpu.dot_dimension_numbers<[1], [0], [0], [1], [0, 0, 1, 1], [], []>} : vector<8x128xbf16>, vector<128x512xbf16>, vector<8x512xf32> -> vector<8x512xf32>
    %57 = arith.addf %53, %56 : vector<8x512xf32>
    %58 = vector.extract_strided_slice %57 {offsets = [0, 0], sizes = [8, 128], strides = [1, 1]} : vector<8x512xf32> to vector<8x128xf32>
    %cst_28 = arith.constant 5.000000e-01 : f32
    %59 = vector.broadcast %cst_28 : f32 to vector<8x128xf32>
    %60 = arith.mulf %59, %58 : vector<8x128xf32>
    %61 = math.tanh %60 : vector<8x128xf32>
    %cst_29 = arith.constant 1.000000e+00 : f32
    %62 = vector.broadcast %cst_29 : f32 to vector<8x128xf32>
    %63 = arith.addf %61, %62 : vector<8x128xf32>
    %cst_30 = arith.constant 5.000000e-01 : f32
    %64 = vector.broadcast %cst_30 : f32 to vector<8x128xf32>
    %65 = arith.mulf %64, %63 : vector<8x128xf32>
    %66 = vector.extract_strided_slice %57 {offsets = [0, 128], sizes = [8, 128], strides = [1, 1]} : vector<8x512xf32> to vector<8x128xf32>
    %cst_31 = arith.constant 5.000000e-01 : f32
    %67 = vector.broadcast %cst_31 : f32 to vector<8x128xf32>
    %68 = arith.mulf %67, %66 : vector<8x128xf32>
    %69 = math.tanh %68 : vector<8x128xf32>
    %cst_32 = arith.constant 1.000000e+00 : f32
    %70 = vector.broadcast %cst_32 : f32 to vector<8x128xf32>
    %71 = arith.addf %69, %70 : vector<8x128xf32>
    %cst_33 = arith.constant 5.000000e-01 : f32
    %72 = vector.broadcast %cst_33 : f32 to vector<8x128xf32>
    %73 = arith.mulf %72, %71 : vector<8x128xf32>
    %74 = vector.extract_strided_slice %57 {offsets = [0, 256], sizes = [8, 128], strides = [1, 1]} : vector<8x512xf32> to vector<8x128xf32>
    %75 = math.tanh %74 : vector<8x128xf32>
    %76 = vector.extract_strided_slice %57 {offsets = [0, 384], sizes = [8, 128], strides = [1, 1]} : vector<8x512xf32> to vector<8x128xf32>
    %cst_34 = arith.constant 5.000000e-01 : f32
    %77 = vector.broadcast %cst_34 : f32 to vector<8x128xf32>
    %78 = arith.mulf %77, %76 : vector<8x128xf32>
    %79 = math.tanh %78 : vector<8x128xf32>
    %cst_35 = arith.constant 1.000000e+00 : f32
    %80 = vector.broadcast %cst_35 : f32 to vector<8x128xf32>
    %81 = arith.addf %79, %80 : vector<8x128xf32>
    %cst_36 = arith.constant 5.000000e-01 : f32
    %82 = vector.broadcast %cst_36 : f32 to vector<8x128xf32>
    %83 = arith.mulf %82, %81 : vector<8x128xf32>
    %84 = arith.mulf %73, %47 : vector<8x128xf32>
    %85 = arith.mulf %65, %75 : vector<8x128xf32>
    %86 = arith.addf %84, %85 : vector<8x128xf32>
    %87 = math.tanh %86 : vector<8x128xf32>
    %88 = arith.mulf %83, %87 : vector<8x128xf32>
    %c2_i32 = arith.constant 2 : i32
    %c8_i32_37 = arith.constant 8 : i32
    %89 = arith.muli %c2_i32, %c8_i32_37 : i32
    %90 = tpu.assume_multiple %89, 8 : i32
    %91 = arith.index_cast %90 : i32 to index
    %c0_38 = arith.constant 0 : index
    %92 = vector.load %arg10[%91, %c0_38] : memref<64x512xf32, #tpu.memory_space<vmem>>, vector<8x512xf32>
    %93 = arith.truncf %88 : vector<8x128xf32> to vector<8x128xbf16>
    %c0_39 = arith.constant 0 : index
    %c0_40 = arith.constant 0 : index
    %94 = vector.load %arg3[%c0_39, %c0_40] : memref<128x512xbf16, #tpu.memory_space<vmem>>, vector<128x512xbf16>
    %cst_41 = arith.constant dense<0.000000e+00> : vector<8x512xf32>
    %95 = tpu.matmul %93, %94, %cst_41 {dimension_numbers = #tpu.dot_dimension_numbers<[1], [0], [0], [1], [0, 0, 1, 1], [], []>} : vector<8x128xbf16>, vector<128x512xbf16>, vector<8x512xf32> -> vector<8x512xf32>
    %96 = arith.addf %92, %95 : vector<8x512xf32>
    %97 = vector.extract_strided_slice %96 {offsets = [0, 0], sizes = [8, 128], strides = [1, 1]} : vector<8x512xf32> to vector<8x128xf32>
    %cst_42 = arith.constant 5.000000e-01 : f32
    %98 = vector.broadcast %cst_42 : f32 to vector<8x128xf32>
    %99 = arith.mulf %98, %97 : vector<8x128xf32>
    %100 = math.tanh %99 : vector<8x128xf32>
    %cst_43 = arith.constant 1.000000e+00 : f32
    %101 = vector.broadcast %cst_43 : f32 to vector<8x128xf32>
    %102 = arith.addf %100, %101 : vector<8x128xf32>
    %cst_44 = arith.constant 5.000000e-01 : f32
    %103 = vector.broadcast %cst_44 : f32 to vector<8x128xf32>
    %104 = arith.mulf %103, %102 : vector<8x128xf32>
    %105 = vector.extract_strided_slice %96 {offsets = [0, 128], sizes = [8, 128], strides = [1, 1]} : vector<8x512xf32> to vector<8x128xf32>
    %cst_45 = arith.constant 5.000000e-01 : f32
    %106 = vector.broadcast %cst_45 : f32 to vector<8x128xf32>
    %107 = arith.mulf %106, %105 : vector<8x128xf32>
    %108 = math.tanh %107 : vector<8x128xf32>
    %cst_46 = arith.constant 1.000000e+00 : f32
    %109 = vector.broadcast %cst_46 : f32 to vector<8x128xf32>
    %110 = arith.addf %108, %109 : vector<8x128xf32>
    %cst_47 = arith.constant 5.000000e-01 : f32
    %111 = vector.broadcast %cst_47 : f32 to vector<8x128xf32>
    %112 = arith.mulf %111, %110 : vector<8x128xf32>
    %113 = vector.extract_strided_slice %96 {offsets = [0, 256], sizes = [8, 128], strides = [1, 1]} : vector<8x512xf32> to vector<8x128xf32>
    %114 = math.tanh %113 : vector<8x128xf32>
    %115 = vector.extract_strided_slice %96 {offsets = [0, 384], sizes = [8, 128], strides = [1, 1]} : vector<8x512xf32> to vector<8x128xf32>
    %cst_48 = arith.constant 5.000000e-01 : f32
    %116 = vector.broadcast %cst_48 : f32 to vector<8x128xf32>
    %117 = arith.mulf %116, %115 : vector<8x128xf32>
    %118 = math.tanh %117 : vector<8x128xf32>
    %cst_49 = arith.constant 1.000000e+00 : f32
    %119 = vector.broadcast %cst_49 : f32 to vector<8x128xf32>
    %120 = arith.addf %118, %119 : vector<8x128xf32>
    %cst_50 = arith.constant 5.000000e-01 : f32
    %121 = vector.broadcast %cst_50 : f32 to vector<8x128xf32>
    %122 = arith.mulf %121, %120 : vector<8x128xf32>
    %123 = arith.mulf %112, %86 : vector<8x128xf32>
    %124 = arith.mulf %104, %114 : vector<8x128xf32>
    %125 = arith.addf %123, %124 : vector<8x128xf32>
    %126 = math.tanh %125 : vector<8x128xf32>
    %127 = arith.mulf %122, %126 : vector<8x128xf32>
    %c3_i32 = arith.constant 3 : i32
    %c8_i32_51 = arith.constant 8 : i32
    %128 = arith.muli %c3_i32, %c8_i32_51 : i32
    %129 = tpu.assume_multiple %128, 8 : i32
    %130 = arith.index_cast %129 : i32 to index
    %c0_52 = arith.constant 0 : index
    %131 = vector.load %arg10[%130, %c0_52] : memref<64x512xf32, #tpu.memory_space<vmem>>, vector<8x512xf32>
    %132 = arith.truncf %127 : vector<8x128xf32> to vector<8x128xbf16>
    %c0_53 = arith.constant 0 : index
    %c0_54 = arith.constant 0 : index
    %133 = vector.load %arg3[%c0_53, %c0_54] : memref<128x512xbf16, #tpu.memory_space<vmem>>, vector<128x512xbf16>
    %cst_55 = arith.constant dense<0.000000e+00> : vector<8x512xf32>
    %134 = tpu.matmul %132, %133, %cst_55 {dimension_numbers = #tpu.dot_dimension_numbers<[1], [0], [0], [1], [0, 0, 1, 1], [], []>} : vector<8x128xbf16>, vector<128x512xbf16>, vector<8x512xf32> -> vector<8x512xf32>
    %135 = arith.addf %131, %134 : vector<8x512xf32>
    %136 = vector.extract_strided_slice %135 {offsets = [0, 0], sizes = [8, 128], strides = [1, 1]} : vector<8x512xf32> to vector<8x128xf32>
    %cst_56 = arith.constant 5.000000e-01 : f32
    %137 = vector.broadcast %cst_56 : f32 to vector<8x128xf32>
    %138 = arith.mulf %137, %136 : vector<8x128xf32>
    %139 = math.tanh %138 : vector<8x128xf32>
    %cst_57 = arith.constant 1.000000e+00 : f32
    %140 = vector.broadcast %cst_57 : f32 to vector<8x128xf32>
    %141 = arith.addf %139, %140 : vector<8x128xf32>
    %cst_58 = arith.constant 5.000000e-01 : f32
    %142 = vector.broadcast %cst_58 : f32 to vector<8x128xf32>
    %143 = arith.mulf %142, %141 : vector<8x128xf32>
    %144 = vector.extract_strided_slice %135 {offsets = [0, 128], sizes = [8, 128], strides = [1, 1]} : vector<8x512xf32> to vector<8x128xf32>
    %cst_59 = arith.constant 5.000000e-01 : f32
    %145 = vector.broadcast %cst_59 : f32 to vector<8x128xf32>
    %146 = arith.mulf %145, %144 : vector<8x128xf32>
    %147 = math.tanh %146 : vector<8x128xf32>
    %cst_60 = arith.constant 1.000000e+00 : f32
    %148 = vector.broadcast %cst_60 : f32 to vector<8x128xf32>
    %149 = arith.addf %147, %148 : vector<8x128xf32>
    %cst_61 = arith.constant 5.000000e-01 : f32
    %150 = vector.broadcast %cst_61 : f32 to vector<8x128xf32>
    %151 = arith.mulf %150, %149 : vector<8x128xf32>
    %152 = vector.extract_strided_slice %135 {offsets = [0, 256], sizes = [8, 128], strides = [1, 1]} : vector<8x512xf32> to vector<8x128xf32>
    %153 = math.tanh %152 : vector<8x128xf32>
    %154 = vector.extract_strided_slice %135 {offsets = [0, 384], sizes = [8, 128], strides = [1, 1]} : vector<8x512xf32> to vector<8x128xf32>
    %cst_62 = arith.constant 5.000000e-01 : f32
    %155 = vector.broadcast %cst_62 : f32 to vector<8x128xf32>
    %156 = arith.mulf %155, %154 : vector<8x128xf32>
    %157 = math.tanh %156 : vector<8x128xf32>
    %cst_63 = arith.constant 1.000000e+00 : f32
    %158 = vector.broadcast %cst_63 : f32 to vector<8x128xf32>
    %159 = arith.addf %157, %158 : vector<8x128xf32>
    %cst_64 = arith.constant 5.000000e-01 : f32
    %160 = vector.broadcast %cst_64 : f32 to vector<8x128xf32>
    %161 = arith.mulf %160, %159 : vector<8x128xf32>
    %162 = arith.mulf %151, %125 : vector<8x128xf32>
    %163 = arith.mulf %143, %153 : vector<8x128xf32>
    %164 = arith.addf %162, %163 : vector<8x128xf32>
    %165 = math.tanh %164 : vector<8x128xf32>
    %166 = arith.mulf %161, %165 : vector<8x128xf32>
    %c4_i32 = arith.constant 4 : i32
    %c8_i32_65 = arith.constant 8 : i32
    %167 = arith.muli %c4_i32, %c8_i32_65 : i32
    %168 = tpu.assume_multiple %167, 8 : i32
    %169 = arith.index_cast %168 : i32 to index
    %c0_66 = arith.constant 0 : index
    %170 = vector.load %arg10[%169, %c0_66] : memref<64x512xf32, #tpu.memory_space<vmem>>, vector<8x512xf32>
    %171 = arith.truncf %166 : vector<8x128xf32> to vector<8x128xbf16>
    %c0_67 = arith.constant 0 : index
    %c0_68 = arith.constant 0 : index
    %172 = vector.load %arg3[%c0_67, %c0_68] : memref<128x512xbf16, #tpu.memory_space<vmem>>, vector<128x512xbf16>
    %cst_69 = arith.constant dense<0.000000e+00> : vector<8x512xf32>
    %173 = tpu.matmul %171, %172, %cst_69 {dimension_numbers = #tpu.dot_dimension_numbers<[1], [0], [0], [1], [0, 0, 1, 1], [], []>} : vector<8x128xbf16>, vector<128x512xbf16>, vector<8x512xf32> -> vector<8x512xf32>
    %174 = arith.addf %170, %173 : vector<8x512xf32>
    %175 = vector.extract_strided_slice %174 {offsets = [0, 0], sizes = [8, 128], strides = [1, 1]} : vector<8x512xf32> to vector<8x128xf32>
    %cst_70 = arith.constant 5.000000e-01 : f32
    %176 = vector.broadcast %cst_70 : f32 to vector<8x128xf32>
    %177 = arith.mulf %176, %175 : vector<8x128xf32>
    %178 = math.tanh %177 : vector<8x128xf32>
    %cst_71 = arith.constant 1.000000e+00 : f32
    %179 = vector.broadcast %cst_71 : f32 to vector<8x128xf32>
    %180 = arith.addf %178, %179 : vector<8x128xf32>
    %cst_72 = arith.constant 5.000000e-01 : f32
    %181 = vector.broadcast %cst_72 : f32 to vector<8x128xf32>
    %182 = arith.mulf %181, %180 : vector<8x128xf32>
    %183 = vector.extract_strided_slice %174 {offsets = [0, 128], sizes = [8, 128], strides = [1, 1]} : vector<8x512xf32> to vector<8x128xf32>
    %cst_73 = arith.constant 5.000000e-01 : f32
    %184 = vector.broadcast %cst_73 : f32 to vector<8x128xf32>
    %185 = arith.mulf %184, %183 : vector<8x128xf32>
    %186 = math.tanh %185 : vector<8x128xf32>
    %cst_74 = arith.constant 1.000000e+00 : f32
    %187 = vector.broadcast %cst_74 : f32 to vector<8x128xf32>
    %188 = arith.addf %186, %187 : vector<8x128xf32>
    %cst_75 = arith.constant 5.000000e-01 : f32
    %189 = vector.broadcast %cst_75 : f32 to vector<8x128xf32>
    %190 = arith.mulf %189, %188 : vector<8x128xf32>
    %191 = vector.extract_strided_slice %174 {offsets = [0, 256], sizes = [8, 128], strides = [1, 1]} : vector<8x512xf32> to vector<8x128xf32>
    %192 = math.tanh %191 : vector<8x128xf32>
    %193 = vector.extract_strided_slice %174 {offsets = [0, 384], sizes = [8, 128], strides = [1, 1]} : vector<8x512xf32> to vector<8x128xf32>
    %cst_76 = arith.constant 5.000000e-01 : f32
    %194 = vector.broadcast %cst_76 : f32 to vector<8x128xf32>
    %195 = arith.mulf %194, %193 : vector<8x128xf32>
    %196 = math.tanh %195 : vector<8x128xf32>
    %cst_77 = arith.constant 1.000000e+00 : f32
    %197 = vector.broadcast %cst_77 : f32 to vector<8x128xf32>
    %198 = arith.addf %196, %197 : vector<8x128xf32>
    %cst_78 = arith.constant 5.000000e-01 : f32
    %199 = vector.broadcast %cst_78 : f32 to vector<8x128xf32>
    %200 = arith.mulf %199, %198 : vector<8x128xf32>
    %201 = arith.mulf %190, %164 : vector<8x128xf32>
    %202 = arith.mulf %182, %192 : vector<8x128xf32>
    %203 = arith.addf %201, %202 : vector<8x128xf32>
    %204 = math.tanh %203 : vector<8x128xf32>
    %205 = arith.mulf %200, %204 : vector<8x128xf32>
    %c5_i32 = arith.constant 5 : i32
    %c8_i32_79 = arith.constant 8 : i32
    %206 = arith.muli %c5_i32, %c8_i32_79 : i32
    %207 = tpu.assume_multiple %206, 8 : i32
    %208 = arith.index_cast %207 : i32 to index
    %c0_80 = arith.constant 0 : index
    %209 = vector.load %arg10[%208, %c0_80] : memref<64x512xf32, #tpu.memory_space<vmem>>, vector<8x512xf32>
    %210 = arith.truncf %205 : vector<8x128xf32> to vector<8x128xbf16>
    %c0_81 = arith.constant 0 : index
    %c0_82 = arith.constant 0 : index
    %211 = vector.load %arg3[%c0_81, %c0_82] : memref<128x512xbf16, #tpu.memory_space<vmem>>, vector<128x512xbf16>
    %cst_83 = arith.constant dense<0.000000e+00> : vector<8x512xf32>
    %212 = tpu.matmul %210, %211, %cst_83 {dimension_numbers = #tpu.dot_dimension_numbers<[1], [0], [0], [1], [0, 0, 1, 1], [], []>} : vector<8x128xbf16>, vector<128x512xbf16>, vector<8x512xf32> -> vector<8x512xf32>
    %213 = arith.addf %209, %212 : vector<8x512xf32>
    %214 = vector.extract_strided_slice %213 {offsets = [0, 0], sizes = [8, 128], strides = [1, 1]} : vector<8x512xf32> to vector<8x128xf32>
    %cst_84 = arith.constant 5.000000e-01 : f32
    %215 = vector.broadcast %cst_84 : f32 to vector<8x128xf32>
    %216 = arith.mulf %215, %214 : vector<8x128xf32>
    %217 = math.tanh %216 : vector<8x128xf32>
    %cst_85 = arith.constant 1.000000e+00 : f32
    %218 = vector.broadcast %cst_85 : f32 to vector<8x128xf32>
    %219 = arith.addf %217, %218 : vector<8x128xf32>
    %cst_86 = arith.constant 5.000000e-01 : f32
    %220 = vector.broadcast %cst_86 : f32 to vector<8x128xf32>
    %221 = arith.mulf %220, %219 : vector<8x128xf32>
    %222 = vector.extract_strided_slice %213 {offsets = [0, 128], sizes = [8, 128], strides = [1, 1]} : vector<8x512xf32> to vector<8x128xf32>
    %cst_87 = arith.constant 5.000000e-01 : f32
    %223 = vector.broadcast %cst_87 : f32 to vector<8x128xf32>
    %224 = arith.mulf %223, %222 : vector<8x128xf32>
    %225 = math.tanh %224 : vector<8x128xf32>
    %cst_88 = arith.constant 1.000000e+00 : f32
    %226 = vector.broadcast %cst_88 : f32 to vector<8x128xf32>
    %227 = arith.addf %225, %226 : vector<8x128xf32>
    %cst_89 = arith.constant 5.000000e-01 : f32
    %228 = vector.broadcast %cst_89 : f32 to vector<8x128xf32>
    %229 = arith.mulf %228, %227 : vector<8x128xf32>
    %230 = vector.extract_strided_slice %213 {offsets = [0, 256], sizes = [8, 128], strides = [1, 1]} : vector<8x512xf32> to vector<8x128xf32>
    %231 = math.tanh %230 : vector<8x128xf32>
    %232 = vector.extract_strided_slice %213 {offsets = [0, 384], sizes = [8, 128], strides = [1, 1]} : vector<8x512xf32> to vector<8x128xf32>
    %cst_90 = arith.constant 5.000000e-01 : f32
    %233 = vector.broadcast %cst_90 : f32 to vector<8x128xf32>
    %234 = arith.mulf %233, %232 : vector<8x128xf32>
    %235 = math.tanh %234 : vector<8x128xf32>
    %cst_91 = arith.constant 1.000000e+00 : f32
    %236 = vector.broadcast %cst_91 : f32 to vector<8x128xf32>
    %237 = arith.addf %235, %236 : vector<8x128xf32>
    %cst_92 = arith.constant 5.000000e-01 : f32
    %238 = vector.broadcast %cst_92 : f32 to vector<8x128xf32>
    %239 = arith.mulf %238, %237 : vector<8x128xf32>
    %240 = arith.mulf %229, %203 : vector<8x128xf32>
    %241 = arith.mulf %221, %231 : vector<8x128xf32>
    %242 = arith.addf %240, %241 : vector<8x128xf32>
    %243 = math.tanh %242 : vector<8x128xf32>
    %244 = arith.mulf %239, %243 : vector<8x128xf32>
    %c6_i32 = arith.constant 6 : i32
    %c8_i32_93 = arith.constant 8 : i32
    %245 = arith.muli %c6_i32, %c8_i32_93 : i32
    %246 = tpu.assume_multiple %245, 8 : i32
    %247 = arith.index_cast %246 : i32 to index
    %c0_94 = arith.constant 0 : index
    %248 = vector.load %arg10[%247, %c0_94] : memref<64x512xf32, #tpu.memory_space<vmem>>, vector<8x512xf32>
    %249 = arith.truncf %244 : vector<8x128xf32> to vector<8x128xbf16>
    %c0_95 = arith.constant 0 : index
    %c0_96 = arith.constant 0 : index
    %250 = vector.load %arg3[%c0_95, %c0_96] : memref<128x512xbf16, #tpu.memory_space<vmem>>, vector<128x512xbf16>
    %cst_97 = arith.constant dense<0.000000e+00> : vector<8x512xf32>
    %251 = tpu.matmul %249, %250, %cst_97 {dimension_numbers = #tpu.dot_dimension_numbers<[1], [0], [0], [1], [0, 0, 1, 1], [], []>} : vector<8x128xbf16>, vector<128x512xbf16>, vector<8x512xf32> -> vector<8x512xf32>
    %252 = arith.addf %248, %251 : vector<8x512xf32>
    %253 = vector.extract_strided_slice %252 {offsets = [0, 0], sizes = [8, 128], strides = [1, 1]} : vector<8x512xf32> to vector<8x128xf32>
    %cst_98 = arith.constant 5.000000e-01 : f32
    %254 = vector.broadcast %cst_98 : f32 to vector<8x128xf32>
    %255 = arith.mulf %254, %253 : vector<8x128xf32>
    %256 = math.tanh %255 : vector<8x128xf32>
    %cst_99 = arith.constant 1.000000e+00 : f32
    %257 = vector.broadcast %cst_99 : f32 to vector<8x128xf32>
    %258 = arith.addf %256, %257 : vector<8x128xf32>
    %cst_100 = arith.constant 5.000000e-01 : f32
    %259 = vector.broadcast %cst_100 : f32 to vector<8x128xf32>
    %260 = arith.mulf %259, %258 : vector<8x128xf32>
    %261 = vector.extract_strided_slice %252 {offsets = [0, 128], sizes = [8, 128], strides = [1, 1]} : vector<8x512xf32> to vector<8x128xf32>
    %cst_101 = arith.constant 5.000000e-01 : f32
    %262 = vector.broadcast %cst_101 : f32 to vector<8x128xf32>
    %263 = arith.mulf %262, %261 : vector<8x128xf32>
    %264 = math.tanh %263 : vector<8x128xf32>
    %cst_102 = arith.constant 1.000000e+00 : f32
    %265 = vector.broadcast %cst_102 : f32 to vector<8x128xf32>
    %266 = arith.addf %264, %265 : vector<8x128xf32>
    %cst_103 = arith.constant 5.000000e-01 : f32
    %267 = vector.broadcast %cst_103 : f32 to vector<8x128xf32>
    %268 = arith.mulf %267, %266 : vector<8x128xf32>
    %269 = vector.extract_strided_slice %252 {offsets = [0, 256], sizes = [8, 128], strides = [1, 1]} : vector<8x512xf32> to vector<8x128xf32>
    %270 = math.tanh %269 : vector<8x128xf32>
    %271 = vector.extract_strided_slice %252 {offsets = [0, 384], sizes = [8, 128], strides = [1, 1]} : vector<8x512xf32> to vector<8x128xf32>
    %cst_104 = arith.constant 5.000000e-01 : f32
    %272 = vector.broadcast %cst_104 : f32 to vector<8x128xf32>
    %273 = arith.mulf %272, %271 : vector<8x128xf32>
    %274 = math.tanh %273 : vector<8x128xf32>
    %cst_105 = arith.constant 1.000000e+00 : f32
    %275 = vector.broadcast %cst_105 : f32 to vector<8x128xf32>
    %276 = arith.addf %274, %275 : vector<8x128xf32>
    %cst_106 = arith.constant 5.000000e-01 : f32
    %277 = vector.broadcast %cst_106 : f32 to vector<8x128xf32>
    %278 = arith.mulf %277, %276 : vector<8x128xf32>
    %279 = arith.mulf %268, %242 : vector<8x128xf32>
    %280 = arith.mulf %260, %270 : vector<8x128xf32>
    %281 = arith.addf %279, %280 : vector<8x128xf32>
    %282 = math.tanh %281 : vector<8x128xf32>
    %283 = arith.mulf %278, %282 : vector<8x128xf32>
    %c7_i32 = arith.constant 7 : i32
    %c8_i32_107 = arith.constant 8 : i32
    %284 = arith.muli %c7_i32, %c8_i32_107 : i32
    %285 = tpu.assume_multiple %284, 8 : i32
    %286 = arith.index_cast %285 : i32 to index
    %c0_108 = arith.constant 0 : index
    %287 = vector.load %arg10[%286, %c0_108] : memref<64x512xf32, #tpu.memory_space<vmem>>, vector<8x512xf32>
    %288 = arith.truncf %283 : vector<8x128xf32> to vector<8x128xbf16>
    %c0_109 = arith.constant 0 : index
    %c0_110 = arith.constant 0 : index
    %289 = vector.load %arg3[%c0_109, %c0_110] : memref<128x512xbf16, #tpu.memory_space<vmem>>, vector<128x512xbf16>
    %cst_111 = arith.constant dense<0.000000e+00> : vector<8x512xf32>
    %290 = tpu.matmul %288, %289, %cst_111 {dimension_numbers = #tpu.dot_dimension_numbers<[1], [0], [0], [1], [0, 0, 1, 1], [], []>} : vector<8x128xbf16>, vector<128x512xbf16>, vector<8x512xf32> -> vector<8x512xf32>
    %291 = arith.addf %287, %290 : vector<8x512xf32>
    %292 = vector.extract_strided_slice %291 {offsets = [0, 0], sizes = [8, 128], strides = [1, 1]} : vector<8x512xf32> to vector<8x128xf32>
    %cst_112 = arith.constant 5.000000e-01 : f32
    %293 = vector.broadcast %cst_112 : f32 to vector<8x128xf32>
    %294 = arith.mulf %293, %292 : vector<8x128xf32>
    %295 = math.tanh %294 : vector<8x128xf32>
    %cst_113 = arith.constant 1.000000e+00 : f32
    %296 = vector.broadcast %cst_113 : f32 to vector<8x128xf32>
    %297 = arith.addf %295, %296 : vector<8x128xf32>
    %cst_114 = arith.constant 5.000000e-01 : f32
    %298 = vector.broadcast %cst_114 : f32 to vector<8x128xf32>
    %299 = arith.mulf %298, %297 : vector<8x128xf32>
    %300 = vector.extract_strided_slice %291 {offsets = [0, 128], sizes = [8, 128], strides = [1, 1]} : vector<8x512xf32> to vector<8x128xf32>
    %cst_115 = arith.constant 5.000000e-01 : f32
    %301 = vector.broadcast %cst_115 : f32 to vector<8x128xf32>
    %302 = arith.mulf %301, %300 : vector<8x128xf32>
    %303 = math.tanh %302 : vector<8x128xf32>
    %cst_116 = arith.constant 1.000000e+00 : f32
    %304 = vector.broadcast %cst_116 : f32 to vector<8x128xf32>
    %305 = arith.addf %303, %304 : vector<8x128xf32>
    %cst_117 = arith.constant 5.000000e-01 : f32
    %306 = vector.broadcast %cst_117 : f32 to vector<8x128xf32>
    %307 = arith.mulf %306, %305 : vector<8x128xf32>
    %308 = vector.extract_strided_slice %291 {offsets = [0, 256], sizes = [8, 128], strides = [1, 1]} : vector<8x512xf32> to vector<8x128xf32>
    %309 = math.tanh %308 : vector<8x128xf32>
    %310 = vector.extract_strided_slice %291 {offsets = [0, 384], sizes = [8, 128], strides = [1, 1]} : vector<8x512xf32> to vector<8x128xf32>
    %cst_118 = arith.constant 5.000000e-01 : f32
    %311 = vector.broadcast %cst_118 : f32 to vector<8x128xf32>
    %312 = arith.mulf %311, %310 : vector<8x128xf32>
    %313 = math.tanh %312 : vector<8x128xf32>
    %cst_119 = arith.constant 1.000000e+00 : f32
    %314 = vector.broadcast %cst_119 : f32 to vector<8x128xf32>
    %315 = arith.addf %313, %314 : vector<8x128xf32>
    %cst_120 = arith.constant 5.000000e-01 : f32
    %316 = vector.broadcast %cst_120 : f32 to vector<8x128xf32>
    %317 = arith.mulf %316, %315 : vector<8x128xf32>
    %318 = arith.mulf %307, %281 : vector<8x128xf32>
    %319 = arith.mulf %299, %309 : vector<8x128xf32>
    %320 = arith.addf %318, %319 : vector<8x128xf32>
    %321 = math.tanh %320 : vector<8x128xf32>
    %322 = arith.mulf %317, %321 : vector<8x128xf32>
    %c8_i32_121 = arith.constant 8 : i32
    %323 = arith.truncf %322 : vector<8x128xf32> to vector<8x128xbf16>
    %c0_122 = arith.constant 0 : index
    %c0_123 = arith.constant 0 : index
    %324 = vector.load %arg5[%c0_122, %c0_123] : memref<128x256xbf16, #tpu.memory_space<vmem>>, vector<128x256xbf16>
    %cst_124 = arith.constant dense<0.000000e+00> : vector<8x256xf32>
    %325 = tpu.matmul %323, %324, %cst_124 {dimension_numbers = #tpu.dot_dimension_numbers<[1], [0], [0], [1], [0, 0, 1, 1], [], []>} : vector<8x128xbf16>, vector<128x256xbf16>, vector<8x256xf32> -> vector<8x256xf32>
    %c0_125 = arith.constant 0 : index
    %c0_126 = arith.constant 0 : index
    %326 = vector.load %arg6[%c0_125, %c0_126] : memref<1x256xf32, #tpu.memory_space<vmem>>, vector<1x256xf32>
    %327 = vector.broadcast %326 : vector<1x256xf32> to vector<8x256xf32>
    %328 = arith.addf %325, %327 : vector<8x256xf32>
    %cst_127 = arith.constant 0.000000e+00 : f32
    %329 = vector.broadcast %cst_127 : f32 to vector<8x256xf32>
    %330 = arith.maximumf %328, %329 : vector<8x256xf32>
    %331 = arith.truncf %330 : vector<8x256xf32> to vector<8x256xbf16>
    %c0_128 = arith.constant 0 : index
    %c0_129 = arith.constant 0 : index
    %332 = vector.load %arg7[%c0_128, %c0_129] : memref<256x128xbf16, #tpu.memory_space<vmem>>, vector<256x128xbf16>
    %cst_130 = arith.constant dense<0.000000e+00> : vector<8x128xf32>
    %333 = tpu.matmul %331, %332, %cst_130 {dimension_numbers = #tpu.dot_dimension_numbers<[1], [0], [0], [1], [0, 0, 1, 1], [], []>} : vector<8x256xbf16>, vector<256x128xbf16>, vector<8x128xf32> -> vector<8x128xf32>
    %c0_131 = arith.constant 0 : index
    %c0_132 = arith.constant 0 : index
    %334 = vector.load %arg8[%c0_131, %c0_132] : memref<1x128xf32, #tpu.memory_space<vmem>>, vector<1x128xf32>
    %335 = vector.broadcast %334 : vector<1x128xf32> to vector<8x128xf32>
    %336 = arith.addf %333, %335 : vector<8x128xf32>
    %337 = tpu.iota {dimensions = array<i32: 1>} : vector<8x128xi32>
    %c6_i32_133 = arith.constant 6 : i32
    %338 = vector.broadcast %c6_i32_133 : i32 to vector<8x128xi32>
    %339 = arith.cmpi slt, %337, %338 : vector<8x128xi32>
    %c6_i32_134 = arith.constant 6 : i32
    %340 = vector.broadcast %c6_i32_134 : i32 to vector<8x128xi32>
    %341 = arith.cmpi eq, %337, %340 : vector<8x128xi32>
    %cst_135 = arith.constant 0.000000e+00 : f32
    %342 = vector.broadcast %cst_135 : f32 to vector<8x128xf32>
    %343 = arith.select %339, %336, %342 : vector<8x128xi1>, vector<8x128xf32>
    %cst_136 = arith.constant dense<0.000000e+00> : vector<8xf32>
    %344 = vector.multi_reduction <add>, %343, %cst_136 [1] : vector<8x128xf32> to vector<8xf32>
    %345 = vector.shape_cast %344 : vector<8xf32> to vector<8x1xf32>
    %cst_137 = arith.constant 0.166666672 : f32
    %346 = vector.broadcast %cst_137 : f32 to vector<8x1xf32>
    %347 = arith.mulf %345, %346 : vector<8x1xf32>
    %cst_138 = arith.constant 0.000000e+00 : f32
    %348 = vector.broadcast %cst_138 : f32 to vector<8x128xf32>
    %349 = arith.select %341, %336, %348 : vector<8x128xi1>, vector<8x128xf32>
    %cst_139 = arith.constant dense<0.000000e+00> : vector<8xf32>
    %350 = vector.multi_reduction <add>, %349, %cst_139 [1] : vector<8x128xf32> to vector<8xf32>
    %351 = vector.shape_cast %350 : vector<8xf32> to vector<8x1xf32>
    %352 = vector.broadcast %351 : vector<8x1xf32> to vector<8x128xf32>
    %353 = arith.addf %336, %352 : vector<8x128xf32>
    %354 = vector.broadcast %347 : vector<8x1xf32> to vector<8x128xf32>
    %355 = arith.subf %353, %354 : vector<8x128xf32>
    %cst_140 = arith.constant 0.000000e+00 : f32
    %356 = vector.broadcast %cst_140 : f32 to vector<8x128xf32>
    %357 = arith.select %339, %355, %356 : vector<8x128xi1>, vector<8x128xf32>
    %c0_141 = arith.constant 0 : index
    %c0_142 = arith.constant 0 : index
    %c0_143 = arith.constant 0 : index
    %358 = vector.load %arg9[%c0_141, %c0_142, %c0_143] : memref<1x8x128xf32, #tpu.memory_space<vmem>>, vector<1x8x128xf32>
    %359 = vector.shape_cast %358 : vector<1x8x128xf32> to vector<8x128xf32>
    %360 = vector.shape_cast %357 : vector<8x128xf32> to vector<1x8x128xf32>
    tpu.vector_store %arg9[%c0_141, %c0_142, %c0_143], %360 {strides = array<i32>} : memref<1x8x128xf32, #tpu.memory_space<vmem>>, vector<1x8x128xf32>,
    return
  }
  func.func @transform_0(%arg0: i32) -> (i32, i32, i32) {
    %c0_i32 = arith.constant 0 : i32
    %c0_i32_0 = arith.constant 0 : i32
    %c0_i32_1 = arith.constant 0 : i32
    return %arg0, %c0_i32, %c0_i32_0 : i32, i32, i32
  }
  func.func @transform_1(%arg0: i32) -> (i32, i32) {
    %c0_i32 = arith.constant 0 : i32
    %c0_i32_0 = arith.constant 0 : i32
    %c0_i32_1 = arith.constant 0 : i32
    return %c0_i32, %c0_i32_0 : i32, i32
  }
  func.func @transform_2(%arg0: i32) -> (i32, i32) {
    %c0_i32 = arith.constant 0 : i32
    %c0_i32_0 = arith.constant 0 : i32
    %c0_i32_1 = arith.constant 0 : i32
    return %c0_i32, %c0_i32_0 : i32, i32
  }
  func.func @transform_3(%arg0: i32) -> (i32, i32) {
    %c0_i32 = arith.constant 0 : i32
    %c0_i32_0 = arith.constant 0 : i32
    %c0_i32_1 = arith.constant 0 : i32
    return %c0_i32, %c0_i32_0 : i32, i32
  }
  func.func @transform_4(%arg0: i32) -> (i32, i32) {
    %c0_i32 = arith.constant 0 : i32
    %c0_i32_0 = arith.constant 0 : i32
    %c0_i32_1 = arith.constant 0 : i32
    return %c0_i32, %c0_i32_0 : i32, i32
  }
  func.func @transform_5(%arg0: i32) -> (i32, i32) {
    %c0_i32 = arith.constant 0 : i32
    %c0_i32_0 = arith.constant 0 : i32
    %c0_i32_1 = arith.constant 0 : i32
    return %c0_i32, %c0_i32_0 : i32, i32
  }
  func.func @transform_6(%arg0: i32) -> (i32, i32) {
    %c0_i32 = arith.constant 0 : i32
    %c0_i32_0 = arith.constant 0 : i32
    %c0_i32_1 = arith.constant 0 : i32
    return %c0_i32, %c0_i32_0 : i32, i32
  }
  func.func @transform_7(%arg0: i32) -> (i32, i32) {
    %c0_i32 = arith.constant 0 : i32
    %c0_i32_0 = arith.constant 0 : i32
    %c0_i32_1 = arith.constant 0 : i32
    return %c0_i32, %c0_i32_0 : i32, i32
  }
  func.func @transform_8(%arg0: i32) -> (i32, i32, i32) {
    %c0_i32 = arith.constant 0 : i32
    %c0_i32_0 = arith.constant 0 : i32
    %c0_i32_1 = arith.constant 0 : i32
    return %arg0, %c0_i32, %c0_i32_0 : i32, i32, i32
  }
}

</mosaic_0001>

<llo_original>
// kernel: duel_ddnq_forward.1
$region0: #{duel_ddnq_forward.1}
  #allocation0 [shape = 'u32[]', space=smem, size = 0x4, offset = 0x4, fixed_abs, tag = 'smem constant byte address 0x4 - core index']
  #allocation1 [shape = 'u32[72,128]{1,0:T(1,128)}', space=vmem, size = 0x9000, scoped, tag = 'internal scratch']
  #allocation2 [shape = 'f32[64,512]{1,0:T(8,128)}', space=vmem, size = 0x20000, scoped, tag = 'scratch operand']
  %s0 = inlined_call_operand.vmem [shape: f32[1,64,16], index: 0, kind: input, shape index: {}]
  %s1 = inlined_call_operand.vmem [shape: bf16[16,512], index: 1, kind: input, shape index: {}]
  %s2 = inlined_call_operand.hbm [shape: bf16[128,512], index: 2, kind: input, shape index: {}]
  %s3 = inlined_call_operand.vmem [shape: f32[1,512], index: 3, kind: input, shape index: {}]
  %s4 = inlined_call_operand.hbm [shape: bf16[128,256], index: 4, kind: input, shape index: {}]
  %s5 = inlined_call_operand.vmem [shape: f32[1,256], index: 5, kind: input, shape index: {}]
  %s6 = inlined_call_operand.hbm [shape: bf16[256,128], index: 6, kind: input, shape index: {}]
  %s7 = inlined_call_operand.vmem [shape: f32[1,128], index: 7, kind: input, shape index: {}]
  %s8 = inlined_call_operand.vmem [shape: f32[1,8,128], index: 8, kind: output, shape index: {}]
  %s9 = sld [smem:[#allocation0]]
  $region54: #{duel_ddnq_forward.1} parent=0
    _
  %s11 = ssub.s32 1, %s9
  %s12 = scalar_select 0, %s11, %s9
  $region1: #{duel_ddnq_forward.1} parent=0
    #allocation3 [shape = 'u8[131072]{0}', space=vmem, size = 0x20000, scoped, tag = 'input window, operand 2, single buffered']
    #allocation4 [shape = 's32[1]{0}', space=sflag, size = 0x4, scoped, tag = 'scoped memory for duel_ddnq_forward.1']
    #allocation5 [shape = 'u8[65536]{0}', space=vmem, size = 0x10000, scoped, tag = 'input window, operand 4, single buffered']
    #allocation6 [shape = 's32[1]{0}', space=sflag, size = 0x4, scoped, tag = 'scoped memory for duel_ddnq_forward.1']
    #allocation7 [shape = 'u8[65536]{0}', space=vmem, size = 0x10000, scoped, tag = 'input window, operand 6, single buffered']
    %13 = vsyncpa [#allocation4], 0
    %14 = vsyncpa [#allocation6], 0
    // Predicated region
    $region2: #{duel_ddnq_forward.1} parent=1 // pred_check
      _
    $region3: #{duel_ddnq_forward.1} parent=1 // pred_check_branch
      %16 = sbr.rel (0) target = $region5
    $region4: #{duel_ddnq_forward.1} parent=1 // pred_region
      _
    $region5: #{duel_ddnq_forward.1} parent=1 // pred_fallthru
      _
    // Predicated region
    $region6: #{duel_ddnq_forward.1} parent=1 // pred_check
      _
    $region7: #{duel_ddnq_forward.1} parent=1 // pred_check_branch
      %18 = sbr.rel (0) target = $region9
    $region8: #{duel_ddnq_forward.1} parent=1 // pred_region
      _
    $region9: #{duel_ddnq_forward.1} parent=1 // pred_fallthru
      _
    // Predicated region
    $region10: #{duel_ddnq_forward.1} parent=1 // pred_check
      _
    $region11: #{duel_ddnq_forward.1} parent=1 // pred_check_branch
      %20 = sbr.rel (0) target = $region13
    $region12: #{duel_ddnq_forward.1} parent=1 // pred_region
      %22 = vsyncadd [#allocation4], 0
      %s23 = sshll.u32 %s2, 4
      %s24 = int_to_ptr.hbm [resolvable:$true] %s23
      %s25 = sshll.u32 [#allocation3], 4
      %s26 = int_to_ptr.vmem [resolvable:$true] %s25
      %31 = dma.hbm_to_vmem [thread:$0]  %s24, 4096, %s26, [#allocation4], 256, 256, 16
    $region13: #{duel_ddnq_forward.1} parent=1 // pred_fallthru
      _
    // Predicated region
    $region14: #{duel_ddnq_forward.1} parent=1 // pred_check
      _
    $region15: #{duel_ddnq_forward.1} parent=1 // pred_check_branch
      %33 = sbr.rel (0) target = $region17
    $region16: #{duel_ddnq_forward.1} parent=1 // pred_region
      _
    $region17: #{duel_ddnq_forward.1} parent=1 // pred_fallthru
      _
    // Predicated region
    $region18: #{duel_ddnq_forward.1} parent=1 // pred_check
      _
    $region19: #{duel_ddnq_forward.1} parent=1 // pred_check_branch
      %35 = sbr.rel (0) target = $region21
    $region20: #{duel_ddnq_forward.1} parent=1 // pred_region
      %37 = vsyncadd [#allocation6], 0
      %s38 = sshll.u32 %s4, 4
      %s39 = int_to_ptr.hbm [resolvable:$true] %s38
      %s40 = sshll.u32 [#allocation5], 4
      %s41 = int_to_ptr.vmem [resolvable:$true] %s40
      %46 = dma.hbm_to_vmem [thread:$0]  %s39, 2048, %s41, [#allocation6], 128, 128, 8
    $region21: #{duel_ddnq_forward.1} parent=1 // pred_fallthru
      _
    // Predicated region
    $region22: #{duel_ddnq_forward.1} parent=1 // pred_check
      _
    $region23: #{duel_ddnq_forward.1} parent=1 // pred_check_branch
      %48 = sbr.rel (0) target = $region25
    $region24: #{duel_ddnq_forward.1} parent=1 // pred_region
      _
    $region25: #{duel_ddnq_forward.1} parent=1 // pred_fallthru
      _
    // Predicated region
    $region26: #{duel_ddnq_forward.1} parent=1 // pred_check
      _
    $region27: #{duel_ddnq_forward.1} parent=1 // pred_check_branch
      %50 = sbr.rel (0) target = $region29
    $region28: #{duel_ddnq_forward.1} parent=1 // pred_region
      %52 = vsyncadd [#allocation6], 0
      %s53 = sshll.u32 %s6, 4
      %s54 = int_to_ptr.hbm [resolvable:$true] %s53
      %s55 = sshll.u32 [#allocation7], 4
      %s56 = int_to_ptr.vmem [resolvable:$true] %s55
      %61 = dma.hbm_to_vmem [thread:$0]  %s54, 2048, %s56, [#allocation6], 64, 64, 4
    $region29: #{duel_ddnq_forward.1} parent=1 // pred_fallthru
      _
    // Predicated region
    $region30: #{duel_ddnq_forward.1} parent=1 // pred_check
      _
    $region31: #{duel_ddnq_forward.1} parent=1 // pred_check_branch
      %63 = sbr.rel (0) target = $region33
    $region32: #{duel_ddnq_forward.1} parent=1 // pred_region
      _
    $region33: #{duel_ddnq_forward.1} parent=1 // pred_fallthru
      _
    // Predicated region
    $region34: #{duel_ddnq_forward.1} parent=1 // pred_check
      _
    $region35: #{duel_ddnq_forward.1} parent=1 // pred_check_branch
      %65 = sbr.rel (0) target = $region37
    $region36: #{duel_ddnq_forward.1} parent=1 // pred_region
      %67 = dma.done [#allocation4], 4096
    $region37: #{duel_ddnq_forward.1} parent=1 // pred_fallthru
      _
    // Predicated region
    $region38: #{duel_ddnq_forward.1} parent=1 // pred_check
      _
    $region39: #{duel_ddnq_forward.1} parent=1 // pred_check_branch
      %69 = sbr.rel (0) target = $region41
    $region40: #{duel_ddnq_forward.1} parent=1 // pred_region
      %71 = dma.done [#allocation6], 2048
    $region41: #{duel_ddnq_forward.1} parent=1 // pred_fallthru
      _
    // Predicated region
    $region42: #{duel_ddnq_forward.1} parent=1 // pred_check
      _
    $region43: #{duel_ddnq_forward.1} parent=1 // pred_check_branch
      %73 = sbr.rel (0) target = $region45
    $region44: #{duel_ddnq_forward.1} parent=1 // pred_region
      %75 = dma.done [#allocation6], 2048
    $region45: #{duel_ddnq_forward.1} parent=1 // pred_fallthru
      _
    %v77 = vld [vmem:[%s0] sm:$0xff]
    %v78 = vld [vmem:[%s0 + $0x8] sm:$0xff]
    %v79 = vld [vmem:[%s0 + $0x10] sm:$0xff]
    %v80 = vld [vmem:[%s0 + $0x18] sm:$0xff]
    %v81 = vld [vmem:[%s0 + $0x20] sm:$0xff]
    %v82 = vld [vmem:[%s0 + $0x28] sm:$0xff]
    %v83 = vld [vmem:[%s0 + $0x30] sm:$0xff]
    %v84 = vld [vmem:[%s0 + $0x38] sm:$0xff]
    %v85 = vpack.c.bf16 %v78, %v77
    %v86 = vpack.c.bf16 %v80, %v79
    %v87 = vpack.c.bf16 %v82, %v81
    %v88 = vpack.c.bf16 %v84, %v83
    %v89 = vld [vmem:[%s1] sm:$0xff]
    %v90 = vld [vmem:[%s1 + $0x8] sm:$0xff]
    %v91 = vld [vmem:[%s1 + $0x10] sm:$0xff]
    %v92 = vld [vmem:[%s1 + $0x18] sm:$0xff]
    %v93 = vld [vmem:[%s3] sm:$0xf]
    %v95 = vperm.slane %v93, 0
    %v96 = vperm.slane %v93, 1
    %v97 = vperm.slane %v93, 2
    %v98 = vperm.slane %v93, 3
    %v107 = vunpack.c.l.b16 %v89
    %v108 = vunpack.c.h.b16 %v89
    %v109 = vunpack.c.l.b16 %v90
    %v110 = vunpack.c.h.b16 %v90
    %v111 = vunpack.c.l.b16 %v91
    %v112 = vunpack.c.h.b16 %v91
    %v113 = vunpack.c.l.b16 %v92
    %v114 = vunpack.c.h.b16 %v92
    %v115 = vpack.c.b16 %v111, %v107
    %v116 = vpack.c.b16 %v112, %v108
    %v117 = vpack.c.b16 %v113, %v109
    %v118 = vpack.c.b16 %v114, %v110
    %vm123 = vcmask 130048
    %v125 = vsel %vm123, %v85, 0
    %v128 = vsel %vm123, %v86, 0
    %v131 = vsel %vm123, %v87, 0
    %v134 = vsel %vm123, %v88, 0
    %136 = vmatpush.bf16.msra.mxu0 0
    %137 = vmatpush.bf16.msra.mxu0 0
    %138 = vmatpush.bf16.msra.mxu0 0
    %139 = vmatpush.bf16.msra.mxu0 0
    %140 = vmatpush.bf16.msra.mxu0 0
    %141 = vmatpush.bf16.msra.mxu0 0
    %142 = vmatpush.bf16.msra.mxu0 0
    %143 = vmatpush.bf16.msra.mxu0 %v115
    %144 = vmatmul.bf16.gmra.mxu0 %v125
    %v145 = vpop.f32.mrf.mxu0
    %v146 = vadd.f32 %v95, %v145
    %v147 = vpop.f32.mrf.mxu0
    %v148 = vadd.f32 %v95, %v147
    %149 = vmatmul.bf16.gmra.mxu0 %v128
    %v150 = vpop.f32.mrf.mxu0
    %v151 = vadd.f32 %v95, %v150
    %v152 = vpop.f32.mrf.mxu0
    %v153 = vadd.f32 %v95, %v152
    %154 = vmatmul.bf16.gmra.mxu0 %v131
    %v155 = vpop.f32.mrf.mxu0
    %v156 = vadd.f32 %v95, %v155
    %v157 = vpop.f32.mrf.mxu0
    %v158 = vadd.f32 %v95, %v157
    %159 = vmatmul.bf16.gmra.mxu0 %v134
    %v160 = vpop.f32.mrf.mxu0
    %v161 = vadd.f32 %v95, %v160
    %v162 = vpop.f32.mrf.mxu0
    %v163 = vadd.f32 %v95, %v162
    %164 = vdwg.mxu0
    %165 = vmatpush.bf16.msra.mxu0 0
    %166 = vmatpush.bf16.msra.mxu0 0
    %167 = vmatpush.bf16.msra.mxu0 0
    %168 = vmatpush.bf16.msra.mxu0 0
    %169 = vmatpush.bf16.msra.mxu0 0
    %170 = vmatpush.bf16.msra.mxu0 0
    %171 = vmatpush.bf16.msra.mxu0 0
    %172 = vmatpush.bf16.msra.mxu0 %v116
    %173 = vmatmul.bf16.gmra.mxu0 %v125
    %v174 = vpop.f32.mrf.mxu0
    %v175 = vadd.f32 %v96, %v174
    %v176 = vpop.f32.mrf.mxu0
    %v177 = vadd.f32 %v96, %v176
    %178 = vmatmul.bf16.gmra.mxu0 %v128
    %v179 = vpop.f32.mrf.mxu0
    %v180 = vadd.f32 %v96, %v179
    %v181 = vpop.f32.mrf.mxu0
    %v182 = vadd.f32 %v96, %v181
    %183 = vmatmul.bf16.gmra.mxu0 %v131
    %v184 = vpop.f32.mrf.mxu0
    %v185 = vadd.f32 %v96, %v184
    %v186 = vpop.f32.mrf.mxu0
    %v187 = vadd.f32 %v96, %v186
    %188 = vmatmul.bf16.gmra.mxu0 %v134
    %v189 = vpop.f32.mrf.mxu0
    %v190 = vadd.f32 %v96, %v189
    %v191 = vpop.f32.mrf.mxu0
    %v192 = vadd.f32 %v96, %v191
    %193 = vdwg.mxu0
    %194 = vmatpush.bf16.msra.mxu0 0
    %195 = vmatpush.bf16.msra.mxu0 0
    %196 = vmatpush.bf16.msra.mxu0 0
    %197 = vmatpush.bf16.msra.mxu0 0
    %198 = vmatpush.bf16.msra.mxu0 0
    %199 = vmatpush.bf16.msra.mxu0 0
    %200 = vmatpush.bf16.msra.mxu0 0
    %201 = vmatpush.bf16.msra.mxu0 %v117
    %202 = vmatmul.bf16.gmra.mxu0 %v125
    %v203 = vpop.f32.mrf.mxu0
    %v204 = vadd.f32 %v97, %v203
    %v205 = vpop.f32.mrf.mxu0
    %v206 = vadd.f32 %v97, %v205
    %207 = vmatmul.bf16.gmra.mxu0 %v128
    %v208 = vpop.f32.mrf.mxu0
    %v209 = vadd.f32 %v97, %v208
    %v210 = vpop.f32.mrf.mxu0
    %v211 = vadd.f32 %v97, %v210
    %212 = vmatmul.bf16.gmra.mxu0 %v131
    %v213 = vpop.f32.mrf.mxu0
    %v214 = vadd.f32 %v97, %v213
    %v215 = vpop.f32.mrf.mxu0
    %v216 = vadd.f32 %v97, %v215
    %217 = vmatmul.bf16.gmra.mxu0 %v134
    %v218 = vpop.f32.mrf.mxu0
    %v219 = vadd.f32 %v97, %v218
    %v220 = vpop.f32.mrf.mxu0
    %v221 = vadd.f32 %v97, %v220
    %222 = vdwg.mxu0
    %223 = vmatpush.bf16.msra.mxu0 0
    %224 = vmatpush.bf16.msra.mxu0 0
    %225 = vmatpush.bf16.msra.mxu0 0
    %226 = vmatpush.bf16.msra.mxu0 0
    %227 = vmatpush.bf16.msra.mxu0 0
    %228 = vmatpush.bf16.msra.mxu0 0
    %229 = vmatpush.bf16.msra.mxu0 0
    %230 = vmatpush.bf16.msra.mxu0 %v118
    %231 = vmatmul.bf16.gmra.mxu0 %v125
    %v232 = vpop.f32.mrf.mxu0
    %v233 = vadd.f32 %v98, %v232
    %v234 = vpop.f32.mrf.mxu0
    %v235 = vadd.f32 %v98, %v234
    %236 = vmatmul.bf16.gmra.mxu0 %v128
    %v237 = vpop.f32.mrf.mxu0
    %v238 = vadd.f32 %v98, %v237
    %v239 = vpop.f32.mrf.mxu0
    %v240 = vadd.f32 %v98, %v239
    %241 = vmatmul.bf16.gmra.mxu0 %v131
    %v242 = vpop.f32.mrf.mxu0
    %v243 = vadd.f32 %v98, %v242
    %v244 = vpop.f32.mrf.mxu0
    %v245 = vadd.f32 %v98, %v244
    %246 = vmatmul.bf16.gmra.mxu0 %v134
    %v247 = vpop.f32.mrf.mxu0
    %v248 = vadd.f32 %v98, %v247
    %v249 = vpop.f32.mrf.mxu0
    %v250 = vadd.f32 %v98, %v249
    %251 = vdwg.mxu0
    %252 = vst [vmem:[#allocation2] sm:$0xff] %v146
    %253 = vst [vmem:[#allocation2 + $0x8] sm:$0xff] %v175
    %254 = vst [vmem:[#allocation2 + $0x10] sm:$0xff] %v204
    %255 = vst [vmem:[#allocation2 + $0x18] sm:$0xff] %v233
    %256 = vst [vmem:[#allocation2 + $0x20] sm:$0xff] %v148
    %257 = vst [vmem:[#allocation2 + $0x28] sm:$0xff] %v177
    %258 = vst [vmem:[#allocation2 + $0x30] sm:$0xff] %v206
    %259 = vst [vmem:[#allocation2 + $0x38] sm:$0xff] %v235
    %260 = vst [vmem:[#allocation2 + $0x40] sm:$0xff] %v151
    %261 = vst [vmem:[#allocation2 + $0x48] sm:$0xff] %v180
    %262 = vst [vmem:[#allocation2 + $0x50] sm:$0xff] %v209
    %263 = vst [vmem:[#allocation2 + $0x58] sm:$0xff] %v238
    %264 = vst [vmem:[#allocation2 + $0x60] sm:$0xff] %v153
    %265 = vst [vmem:[#allocation2 + $0x68] sm:$0xff] %v182
    %266 = vst [vmem:[#allocation2 + $0x70] sm:$0xff] %v211
    %267 = vst [vmem:[#allocation2 + $0x78] sm:$0xff] %v240
    %268 = vst [vmem:[#allocation2 + $0x80] sm:$0xff] %v156
    %269 = vst [vmem:[#allocation2 + $0x88] sm:$0xff] %v185
    %270 = vst [vmem:[#allocation2 + $0x90] sm:$0xff] %v214
    %271 = vst [vmem:[#allocation2 + $0x98] sm:$0xff] %v243
    %272 = vst [vmem:[#allocation2 + $0xa0] sm:$0xff] %v158
    %273 = vst [vmem:[#allocation2 + $0xa8] sm:$0xff] %v187
    %274 = vst [vmem:[#allocation2 + $0xb0] sm:$0xff] %v216
    %275 = vst [vmem:[#allocation2 + $0xb8] sm:$0xff] %v245
    %276 = vst [vmem:[#allocation2 + $0xc0] sm:$0xff] %v161
    %277 = vst [vmem:[#allocation2 + $0xc8] sm:$0xff] %v190
    %278 = vst [vmem:[#allocation2 + $0xd0] sm:$0xff] %v219
    %279 = vst [vmem:[#allocation2 + $0xd8] sm:$0xff] %v248
    %280 = vst [vmem:[#allocation2 + $0xe0] sm:$0xff] %v163
    %281 = vst [vmem:[#allocation2 + $0xe8] sm:$0xff] %v192
    %282 = vst [vmem:[#allocation2 + $0xf0] sm:$0xff] %v221
    %283 = vst [vmem:[#allocation2 + $0xf8] sm:$0xff] %v250
    %s284 = smul.u32 0, 4
    %s285 = smul.addr %s284, 8
    %s286 = scalar_lea.vmem [#allocation2], %s285
    %v287 = vld [vmem:[%s286] sm:$0xff]
    %v288 = vld [vmem:[%s286 + $0x8] sm:$0xff]
    %v289 = vld [vmem:[%s286 + $0x10] sm:$0xff]
    %v290 = vld [vmem:[%s286 + $0x18] sm:$0xff]
    %v291 = vld [vmem:[#allocation3] sm:$0xff]
    %v292 = vld [vmem:[#allocation3 + $0x8] sm:$0xff]
    %v293 = vld [vmem:[#allocation3 + $0x10] sm:$0xff]
    %v294 = vld [vmem:[#allocation3 + $0x18] sm:$0xff]
    %v295 = vld [vmem:[#allocation3 + $0x20] sm:$0xff]
    %v296 = vld [vmem:[#allocation3 + $0x28] sm:$0xff]
    %v297 = vld [vmem:[#allocation3 + $0x30] sm:$0xff]
    %v298 = vld [vmem:[#allocation3 + $0x38] sm:$0xff]
    %v299 = vld [vmem:[#allocation3 + $0x40] sm:$0xff]
    %v300 = vld [vmem:[#allocation3 + $0x48] sm:$0xff]
    %v301 = vld [vmem:[#allocation3 + $0x50] sm:$0xff]
    %v302 = vld [vmem:[#allocation3 + $0x58] sm:$0xff]
    %v303 = vld [vmem:[#allocation3 + $0x60] sm:$0xff]
    %v304 = vld [vmem:[#allocation3 + $0x68] sm:$0xff]
    %v305 = vld [vmem:[#allocation3 + $0x70] sm:$0xff]
    %v306 = vld [vmem:[#allocation3 + $0x78] sm:$0xff]
    %v307 = vld [vmem:[#allocation3 + $0x80] sm:$0xff]
    %v308 = vld [vmem:[#allocation3 + $0x88] sm:$0xff]
    %v309 = vld [vmem:[#allocation3 + $0x90] sm:$0xff]
    %v310 = vld [vmem:[#allocation3 + $0x98] sm:$0xff]
    %v311 = vld [vmem:[#allocation3 + $0xa0] sm:$0xff]
    %v312 = vld [vmem:[#allocation3 + $0xa8] sm:$0xff]
    %v313 = vld [vmem:[#allocation3 + $0xb0] sm:$0xff]
    %v314 = vld [vmem:[#allocation3 + $0xb8] sm:$0xff]
    %v315 = vld [vmem:[#allocation3 + $0xc0] sm:$0xff]
    %v316 = vld [vmem:[#allocation3 + $0xc8] sm:$0xff]
    %v317 = vld [vmem:[#allocation3 + $0xd0] sm:$0xff]
    %v318 = vld [vmem:[#allocation3 + $0xd8] sm:$0xff]
    %v319 = vld [vmem:[#allocation3 + $0xe0] sm:$0xff]
    %v320 = vld [vmem:[#allocation3 + $0xe8] sm:$0xff]
    %v321 = vld [vmem:[#allocation3 + $0xf0] sm:$0xff]
    %v322 = vld [vmem:[#allocation3 + $0xf8] sm:$0xff]
    %v355 = vunpack.c.l.b16 %v291
    %v356 = vunpack.c.h.b16 %v291
    %v357 = vunpack.c.l.b16 %v292
    %v358 = vunpack.c.h.b16 %v292
    %v359 = vunpack.c.l.b16 %v293
    %v360 = vunpack.c.h.b16 %v293
    %v361 = vunpack.c.l.b16 %v294
    %v362 = vunpack.c.h.b16 %v294
    %v363 = vunpack.c.l.b16 %v295
    %v364 = vunpack.c.h.b16 %v295
    %v365 = vunpack.c.l.b16 %v296
    %v366 = vunpack.c.h.b16 %v296
    %v367 = vunpack.c.l.b16 %v297
    %v368 = vunpack.c.h.b16 %v297
    %v369 = vunpack.c.l.b16 %v298
    %v370 = vunpack.c.h.b16 %v298
    %v371 = vunpack.c.l.b16 %v299
    %v372 = vunpack.c.h.b16 %v299
    %v373 = vunpack.c.l.b16 %v300
    %v374 = vunpack.c.h.b16 %v300
    %v375 = vunpack.c.l.b16 %v301
    %v376 = vunpack.c.h.b16 %v301
    %v377 = vunpack.c.l.b16 %v302
    %v378 = vunpack.c.h.b16 %v302
    %v379 = vunpack.c.l.b16 %v303
    %v380 = vunpack.c.h.b16 %v303
    %v381 = vunpack.c.l.b16 %v304
    %v382 = vunpack.c.h.b16 %v304
    %v383 = vunpack.c.l.b16 %v305
    %v384 = vunpack.c.h.b16 %v305
    %v385 = vunpack.c.l.b16 %v306
    %v386 = vunpack.c.h.b16 %v306
    %v387 = vunpack.c.l.b16 %v307
    %v388 = vunpack.c.h.b16 %v307
    %v389 = vunpack.c.l.b16 %v308
    %v390 = vunpack.c.h.b16 %v308
    %v391 = vunpack.c.l.b16 %v309
    %v392 = vunpack.c.h.b16 %v309
    %v393 = vunpack.c.l.b16 %v310
    %v394 = vunpack.c.h.b16 %v310
    %v395 = vunpack.c.l.b16 %v311
    %v396 = vunpack.c.h.b16 %v311
    %v397 = vunpack.c.l.b16 %v312
    %v398 = vunpack.c.h.b16 %v312
    %v399 = vunpack.c.l.b16 %v313
    %v400 = vunpack.c.h.b16 %v313
    %v401 = vunpack.c.l.b16 %v314
    %v402 = vunpack.c.h.b16 %v314
    %v403 = vunpack.c.l.b16 %v315
    %v404 = vunpack.c.h.b16 %v315
    %v405 = vunpack.c.l.b16 %v316
    %v406 = vunpack.c.h.b16 %v316
    %v407 = vunpack.c.l.b16 %v317
    %v408 = vunpack.c.h.b16 %v317
    %v409 = vunpack.c.l.b16 %v318
    %v410 = vunpack.c.h.b16 %v318
    %v411 = vunpack.c.l.b16 %v319
    %v412 = vunpack.c.h.b16 %v319
    %v413 = vunpack.c.l.b16 %v320
    %v414 = vunpack.c.h.b16 %v320
    %v415 = vunpack.c.l.b16 %v321
    %v416 = vunpack.c.h.b16 %v321
    %v417 = vunpack.c.l.b16 %v322
    %v418 = vunpack.c.h.b16 %v322
    %v419 = vpack.c.b16 %v359, %v355
    %v420 = vpack.c.b16 %v360, %v356
    %v421 = vpack.c.b16 %v361, %v357
    %v422 = vpack.c.b16 %v362, %v358
    %v423 = vpack.c.b16 %v367, %v363
    %v424 = vpack.c.b16 %v368, %v364
    %v425 = vpack.c.b16 %v369, %v365
    %v426 = vpack.c.b16 %v370, %v366
    %v427 = vpack.c.b16 %v375, %v371
    %v428 = vpack.c.b16 %v376, %v372
    %v429 = vpack.c.b16 %v377, %v373
    %v430 = vpack.c.b16 %v378, %v374
    %v431 = vpack.c.b16 %v383, %v379
    %v432 = vpack.c.b16 %v384, %v380
    %v433 = vpack.c.b16 %v385, %v381
    %v434 = vpack.c.b16 %v386, %v382
    %v435 = vpack.c.b16 %v391, %v387
    %v436 = vpack.c.b16 %v392, %v388
    %v437 = vpack.c.b16 %v393, %v389
    %v438 = vpack.c.b16 %v394, %v390
    %v439 = vpack.c.b16 %v399, %v395
    %v440 = vpack.c.b16 %v400, %v396
    %v441 = vpack.c.b16 %v401, %v397
    %v442 = vpack.c.b16 %v402, %v398
    %v443 = vpack.c.b16 %v407, %v403
    %v444 = vpack.c.b16 %v408, %v404
    %v445 = vpack.c.b16 %v409, %v405
    %v446 = vpack.c.b16 %v410, %v406
    %v447 = vpack.c.b16 %v415, %v411
    %v448 = vpack.c.b16 %v416, %v412
    %v449 = vpack.c.b16 %v417, %v413
    %v450 = vpack.c.b16 %v418, %v414
    %483 = vmatpush.bf16.msra.mxu0 %v447
    %484 = vmatpush.bf16.msra.mxu0 %v443
    %485 = vmatpush.bf16.msra.mxu0 %v439
    %486 = vmatpush.bf16.msra.mxu0 %v435
    %487 = vmatpush.bf16.msra.mxu0 %v431
    %488 = vmatpush.bf16.msra.mxu0 %v427
    %489 = vmatpush.bf16.msra.mxu0 %v423
    %490 = vmatpush.bf16.msra.mxu0 %v419
    %491 = vmatmul.bf16.gmra.mxu0 0
    %v492 = vpop.f32.mrf.mxu0
    %v493 = vadd.f32 0.0, %v492
    %v494 = vpop.f32.mrf.mxu0
    %495 = vdwg.mxu0
    %496 = vmatpush.bf16.msra.mxu0 %v448
    %497 = vmatpush.bf16.msra.mxu0 %v444
    %498 = vmatpush.bf16.msra.mxu0 %v440
    %499 = vmatpush.bf16.msra.mxu0 %v436
    %500 = vmatpush.bf16.msra.mxu0 %v432
    %501 = vmatpush.bf16.msra.mxu0 %v428
    %502 = vmatpush.bf16.msra.mxu0 %v424
    %503 = vmatpush.bf16.msra.mxu0 %v420
    %504 = vmatmul.bf16.gmra.mxu0 0
    %v505 = vpop.f32.mrf.mxu0
    %v506 = vadd.f32 0.0, %v505
    %v507 = vpop.f32.mrf.mxu0
    %508 = vdwg.mxu0
    %509 = vmatpush.bf16.msra.mxu0 %v449
    %510 = vmatpush.bf16.msra.mxu0 %v445
    %511 = vmatpush.bf16.msra.mxu0 %v441
    %512 = vmatpush.bf16.msra.mxu0 %v437
    %513 = vmatpush.bf16.msra.mxu0 %v433
    %514 = vmatpush.bf16.msra.mxu0 %v429
    %515 = vmatpush.bf16.msra.mxu0 %v425
    %516 = vmatpush.bf16.msra.mxu0 %v421
    %517 = vmatmul.bf16.gmra.mxu0 0
    %v518 = vpop.f32.mrf.mxu0
    %v519 = vadd.f32 0.0, %v518
    %v520 = vpop.f32.mrf.mxu0
    %521 = vdwg.mxu0
    %522 = vmatpush.bf16.msra.mxu0 %v450
    %523 = vmatpush.bf16.msra.mxu0 %v446
    %524 = vmatpush.bf16.msra.mxu0 %v442
    %525 = vmatpush.bf16.msra.mxu0 %v438
    %526 = vmatpush.bf16.msra.mxu0 %v434
    %527 = vmatpush.bf16.msra.mxu0 %v430
    %528 = vmatpush.bf16.msra.mxu0 %v426
    %529 = vmatpush.bf16.msra.mxu0 %v422
    %530 = vmatmul.bf16.gmra.mxu0 0
    %v531 = vpop.f32.mrf.mxu0
    %v532 = vadd.f32 0.0, %v531
    %v533 = vpop.f32.mrf.mxu0
    %534 = vdwg.mxu0
    %v535 = vadd.f32 %v287, %v493
    %v536 = vadd.f32 %v288, %v506
    %v537 = vadd.f32 %v289, %v519
    %v538 = vadd.f32 %v290, %v532
    %v539 = vmul.f32 %v535, 0.5
    %v540 = vtanh.pop %v539
    %v541 = vadd.f32 %v540, 1.0
    %v542 = vmul.f32 %v541, 0.5
    %v543 = vmul.f32 %v536, 0.5
    %v544 = vtanh.pop %v543
    %v545 = vadd.f32 %v544, 1.0
    %v546 = vmul.f32 %v545, 0.5
    %v547 = vtanh.pop %v537
    %v548 = vmul.f32 %v538, 0.5
    %v549 = vtanh.pop %v548
    %v550 = vadd.f32 %v549, 1.0
    %v551 = vmul.f32 %v550, 0.5
    %v552 = vmul.f32 %v546, 0.0
    %v553 = vmul.f32 %v542, %v547
    %v554 = vadd.f32 %v552, %v553
    %v555 = vtanh.pop %v554
    %v556 = vmul.f32 %v551, %v555
    %s557 = smul.u32 1, 4
    %s558 = smul.addr %s557, 8
    %s559 = scalar_lea.vmem [#allocation2], %s558
    %v560 = vld [vmem:[%s559] sm:$0xff]
    %v561 = vld [vmem:[%s559 + $0x8] sm:$0xff]
    %v562 = vld [vmem:[%s559 + $0x10] sm:$0xff]
    %v563 = vld [vmem:[%s559 + $0x18] sm:$0xff]
    %v564 = vpack.c.bf16 %v556, %v556
    %565 = vmatpush.bf16.msra.mxu0 %v447
    %566 = vmatpush.bf16.msra.mxu0 %v443
    %567 = vmatpush.bf16.msra.mxu0 %v439
    %568 = vmatpush.bf16.msra.mxu0 %v435
    %569 = vmatpush.bf16.msra.mxu0 %v431
    %570 = vmatpush.bf16.msra.mxu0 %v427
    %571 = vmatpush.bf16.msra.mxu0 %v423
    %572 = vmatpush.bf16.msra.mxu0 %v419
    %573 = vmatmul.bf16.gmra.mxu0 %v564
    %v574 = vpop.f32.mrf.mxu0
    %v575 = vadd.f32 0.0, %v574
    %v576 = vpop.f32.mrf.mxu0
    %577 = vdwg.mxu0
    %578 = vmatpush.bf16.msra.mxu0 %v448
    %579 = vmatpush.bf16.msra.mxu0 %v444
    %580 = vmatpush.bf16.msra.mxu0 %v440
    %581 = vmatpush.bf16.msra.mxu0 %v436
    %582 = vmatpush.bf16.msra.mxu0 %v432
    %583 = vmatpush.bf16.msra.mxu0 %v428
    %584 = vmatpush.bf16.msra.mxu0 %v424
    %585 = vmatpush.bf16.msra.mxu0 %v420
    %586 = vmatmul.bf16.gmra.mxu0 %v564
    %v587 = vpop.f32.mrf.mxu0
    %v588 = vadd.f32 0.0, %v587
    %v589 = vpop.f32.mrf.mxu0
    %590 = vdwg.mxu0
    %591 = vmatpush.bf16.msra.mxu0 %v449
    %592 = vmatpush.bf16.msra.mxu0 %v445
    %593 = vmatpush.bf16.msra.mxu0 %v441
    %594 = vmatpush.bf16.msra.mxu0 %v437
    %595 = vmatpush.bf16.msra.mxu0 %v433
    %596 = vmatpush.bf16.msra.mxu0 %v429
    %597 = vmatpush.bf16.msra.mxu0 %v425
    %598 = vmatpush.bf16.msra.mxu0 %v421
    %599 = vmatmul.bf16.gmra.mxu0 %v564
    %v600 = vpop.f32.mrf.mxu0
    %v601 = vadd.f32 0.0, %v600
    %v602 = vpop.f32.mrf.mxu0
    %603 = vdwg.mxu0
    %604 = vmatpush.bf16.msra.mxu0 %v450
    %605 = vmatpush.bf16.msra.mxu0 %v446
    %606 = vmatpush.bf16.msra.mxu0 %v442
    %607 = vmatpush.bf16.msra.mxu0 %v438
    %608 = vmatpush.bf16.msra.mxu0 %v434
    %609 = vmatpush.bf16.msra.mxu0 %v430
    %610 = vmatpush.bf16.msra.mxu0 %v426
    %611 = vmatpush.bf16.msra.mxu0 %v422
    %612 = vmatmul.bf16.gmra.mxu0 %v564
    %v613 = vpop.f32.mrf.mxu0
    %v614 = vadd.f32 0.0, %v613
    %v615 = vpop.f32.mrf.mxu0
    %616 = vdwg.mxu0
    %v617 = vadd.f32 %v560, %v575
    %v618 = vadd.f32 %v561, %v588
    %v619 = vadd.f32 %v562, %v601
    %v620 = vadd.f32 %v563, %v614
    %v621 = vmul.f32 %v617, 0.5
    %v622 = vtanh.pop %v621
    %v623 = vadd.f32 %v622, 1.0
    %v624 = vmul.f32 %v623, 0.5
    %v625 = vmul.f32 %v618, 0.5
    %v626 = vtanh.pop %v625
    %v627 = vadd.f32 %v626, 1.0
    %v628 = vmul.f32 %v627, 0.5
    %v629 = vtanh.pop %v619
    %v630 = vmul.f32 %v620, 0.5
    %v631 = vtanh.pop %v630
    %v632 = vadd.f32 %v631, 1.0
    %v633 = vmul.f32 %v632, 0.5
    %v634 = vmul.f32 %v628, %v554
    %v635 = vmul.f32 %v624, %v629
    %v636 = vadd.f32 %v634, %v635
    %v637 = vtanh.pop %v636
    %v638 = vmul.f32 %v633, %v637
    %s639 = smul.u32 2, 4
    %s640 = smul.addr %s639, 8
    %s641 = scalar_lea.vmem [#allocation2], %s640
    %v642 = vld [vmem:[%s641] sm:$0xff]
    %v643 = vld [vmem:[%s641 + $0x8] sm:$0xff]
    %v644 = vld [vmem:[%s641 + $0x10] sm:$0xff]
    %v645 = vld [vmem:[%s641 + $0x18] sm:$0xff]
    %v646 = vpack.c.bf16 %v638, %v638
    %647 = vmatpush.bf16.msra.mxu0 %v447
    %648 = vmatpush.bf16.msra.mxu0 %v443
    %649 = vmatpush.bf16.msra.mxu0 %v439
    %650 = vmatpush.bf16.msra.mxu0 %v435
    %651 = vmatpush.bf16.msra.mxu0 %v431
    %652 = vmatpush.bf16.msra.mxu0 %v427
    %653 = vmatpush.bf16.msra.mxu0 %v423
    %654 = vmatpush.bf16.msra.mxu0 %v419
    %655 = vmatmul.bf16.gmra.mxu0 %v646
    %v656 = vpop.f32.mrf.mxu0
    %v657 = vadd.f32 0.0, %v656
    %v658 = vpop.f32.mrf.mxu0
    %659 = vdwg.mxu0
    %660 = vmatpush.bf16.msra.mxu0 %v448
    %661 = vmatpush.bf16.msra.mxu0 %v444
    %662 = vmatpush.bf16.msra.mxu0 %v440
    %663 = vmatpush.bf16.msra.mxu0 %v436
    %664 = vmatpush.bf16.msra.mxu0 %v432
    %665 = vmatpush.bf16.msra.mxu0 %v428
    %666 = vmatpush.bf16.msra.mxu0 %v424
    %667 = vmatpush.bf16.msra.mxu0 %v420
    %668 = vmatmul.bf16.gmra.mxu0 %v646
    %v669 = vpop.f32.mrf.mxu0
    %v670 = vadd.f32 0.0, %v669
    %v671 = vpop.f32.mrf.mxu0
    %672 = vdwg.mxu0
    %673 = vmatpush.bf16.msra.mxu0 %v449
    %674 = vmatpush.bf16.msra.mxu0 %v445
    %675 = vmatpush.bf16.msra.mxu0 %v441
    %676 = vmatpush.bf16.msra.mxu0 %v437
    %677 = vmatpush.bf16.msra.mxu0 %v433
    %678 = vmatpush.bf16.msra.mxu0 %v429
    %679 = vmatpush.bf16.msra.mxu0 %v425
    %680 = vmatpush.bf16.msra.mxu0 %v421
    %681 = vmatmul.bf16.gmra.mxu0 %v646
    %v682 = vpop.f32.mrf.mxu0
    %v683 = vadd.f32 0.0, %v682
    %v684 = vpop.f32.mrf.mxu0
    %685 = vdwg.mxu0
    %686 = vmatpush.bf16.msra.mxu0 %v450
    %687 = vmatpush.bf16.msra.mxu0 %v446
    %688 = vmatpush.bf16.msra.mxu0 %v442
    %689 = vmatpush.bf16.msra.mxu0 %v438
    %690 = vmatpush.bf16.msra.mxu0 %v434
    %691 = vmatpush.bf16.msra.mxu0 %v430
    %692 = vmatpush.bf16.msra.mxu0 %v426
    %693 = vmatpush.bf16.msra.mxu0 %v422
    %694 = vmatmul.bf16.gmra.mxu0 %v646
    %v695 = vpop.f32.mrf.mxu0
    %v696 = vadd.f32 0.0, %v695
    %v697 = vpop.f32.mrf.mxu0
    %698 = vdwg.mxu0
    %v699 = vadd.f32 %v642, %v657
    %v700 = vadd.f32 %v643, %v670
    %v701 = vadd.f32 %v644, %v683
    %v702 = vadd.f32 %v645, %v696
    %v703 = vmul.f32 %v699, 0.5
    %v704 = vtanh.pop %v703
    %v705 = vadd.f32 %v704, 1.0
    %v706 = vmul.f32 %v705, 0.5
    %v707 = vmul.f32 %v700, 0.5
    %v708 = vtanh.pop %v707
    %v709 = vadd.f32 %v708, 1.0
    %v710 = vmul.f32 %v709, 0.5
    %v711 = vtanh.pop %v701
    %v712 = vmul.f32 %v702, 0.5
    %v713 = vtanh.pop %v712
    %v714 = vadd.f32 %v713, 1.0
    %v715 = vmul.f32 %v714, 0.5
    %v716 = vmul.f32 %v710, %v636
    %v717 = vmul.f32 %v706, %v711
    %v718 = vadd.f32 %v716, %v717
    %v719 = vtanh.pop %v718
    %v720 = vmul.f32 %v715, %v719
    %s721 = smul.u32 3, 4
    %s722 = smul.addr %s721, 8
    %s723 = scalar_lea.vmem [#allocation2], %s722
    %v724 = vld [vmem:[%s723] sm:$0xff]
    %v725 = vld [vmem:[%s723 + $0x8] sm:$0xff]
    %v726 = vld [vmem:[%s723 + $0x10] sm:$0xff]
    %v727 = vld [vmem:[%s723 + $0x18] sm:$0xff]
    %v728 = vpack.c.bf16 %v720, %v720
    %729 = vmatpush.bf16.msra.mxu0 %v447
    %730 = vmatpush.bf16.msra.mxu0 %v443
    %731 = vmatpush.bf16.msra.mxu0 %v439
    %732 = vmatpush.bf16.msra.mxu0 %v435
    %733 = vmatpush.bf16.msra.mxu0 %v431
    %734 = vmatpush.bf16.msra.mxu0 %v427
    %735 = vmatpush.bf16.msra.mxu0 %v423
    %736 = vmatpush.bf16.msra.mxu0 %v419
    %737 = vmatmul.bf16.gmra.mxu0 %v728
    %v738 = vpop.f32.mrf.mxu0
    %v739 = vadd.f32 0.0, %v738
    %v740 = vpop.f32.mrf.mxu0
    %741 = vdwg.mxu0
    %742 = vmatpush.bf16.msra.mxu0 %v448
    %743 = vmatpush.bf16.msra.mxu0 %v444
    %744 = vmatpush.bf16.msra.mxu0 %v440
    %745 = vmatpush.bf16.msra.mxu0 %v436
    %746 = vmatpush.bf16.msra.mxu0 %v432
    %747 = vmatpush.bf16.msra.mxu0 %v428
    %748 = vmatpush.bf16.msra.mxu0 %v424
    %749 = vmatpush.bf16.msra.mxu0 %v420
    %750 = vmatmul.bf16.gmra.mxu0 %v728
    %v751 = vpop.f32.mrf.mxu0
    %v752 = vadd.f32 0.0, %v751
    %v753 = vpop.f32.mrf.mxu0
    %754 = vdwg.mxu0
    %755 = vmatpush.bf16.msra.mxu0 %v449
    %756 = vmatpush.bf16.msra.mxu0 %v445
    %757 = vmatpush.bf16.msra.mxu0 %v441
    %758 = vmatpush.bf16.msra.mxu0 %v437
    %759 = vmatpush.bf16.msra.mxu0 %v433
    %760 = vmatpush.bf16.msra.mxu0 %v429
    %761 = vmatpush.bf16.msra.mxu0 %v425
    %762 = vmatpush.bf16.msra.mxu0 %v421
    %763 = vmatmul.bf16.gmra.mxu0 %v728
    %v764 = vpop.f32.mrf.mxu0
    %v765 = vadd.f32 0.0, %v764
    %v766 = vpop.f32.mrf.mxu0
    %767 = vdwg.mxu0
    %768 = vmatpush.bf16.msra.mxu0 %v450
    %769 = vmatpush.bf16.msra.mxu0 %v446
    %770 = vmatpush.bf16.msra.mxu0 %v442
    %771 = vmatpush.bf16.msra.mxu0 %v438
    %772 = vmatpush.bf16.msra.mxu0 %v434
    %773 = vmatpush.bf16.msra.mxu0 %v430
    %774 = vmatpush.bf16.msra.mxu0 %v426
    %775 = vmatpush.bf16.msra.mxu0 %v422
    %776 = vmatmul.bf16.gmra.mxu0 %v728
    %v777 = vpop.f32.mrf.mxu0
    %v778 = vadd.f32 0.0, %v777
    %v779 = vpop.f32.mrf.mxu0
    %780 = vdwg.mxu0
    %v781 = vadd.f32 %v724, %v739
    %v782 = vadd.f32 %v725, %v752
    %v783 = vadd.f32 %v726, %v765
    %v784 = vadd.f32 %v727, %v778
    %v785 = vmul.f32 %v781, 0.5
    %v786 = vtanh.pop %v785
    %v787 = vadd.f32 %v786, 1.0
    %v788 = vmul.f32 %v787, 0.5
    %v789 = vmul.f32 %v782, 0.5
    %v790 = vtanh.pop %v789
    %v791 = vadd.f32 %v790, 1.0
    %v792 = vmul.f32 %v791, 0.5
    %v793 = vtanh.pop %v783
    %v794 = vmul.f32 %v784, 0.5
    %v795 = vtanh.pop %v794
    %v796 = vadd.f32 %v795, 1.0
    %v797 = vmul.f32 %v796, 0.5
    %v798 = vmul.f32 %v792, %v718
    %v799 = vmul.f32 %v788, %v793
    %v800 = vadd.f32 %v798, %v799
    %v801 = vtanh.pop %v800
    %v802 = vmul.f32 %v797, %v801
    %s803 = smul.u32 4, 4
    %s804 = smul.addr %s803, 8
    %s805 = scalar_lea.vmem [#allocation2], %s804
    %v806 = vld [vmem:[%s805] sm:$0xff]
    %v807 = vld [vmem:[%s805 + $0x8] sm:$0xff]
    %v808 = vld [vmem:[%s805 + $0x10] sm:$0xff]
    %v809 = vld [vmem:[%s805 + $0x18] sm:$0xff]
    %v810 = vpack.c.bf16 %v802, %v802
    %811 = vmatpush.bf16.msra.mxu0 %v447
    %812 = vmatpush.bf16.msra.mxu0 %v443
    %813 = vmatpush.bf16.msra.mxu0 %v439
    %814 = vmatpush.bf16.msra.mxu0 %v435
    %815 = vmatpush.bf16.msra.mxu0 %v431
    %816 = vmatpush.bf16.msra.mxu0 %v427
    %817 = vmatpush.bf16.msra.mxu0 %v423
    %818 = vmatpush.bf16.msra.mxu0 %v419
    %819 = vmatmul.bf16.gmra.mxu0 %v810
    %v820 = vpop.f32.mrf.mxu0
    %v821 = vadd.f32 0.0, %v820
    %v822 = vpop.f32.mrf.mxu0
    %823 = vdwg.mxu0
    %824 = vmatpush.bf16.msra.mxu0 %v448
    %825 = vmatpush.bf16.msra.mxu0 %v444
    %826 = vmatpush.bf16.msra.mxu0 %v440
    %827 = vmatpush.bf16.msra.mxu0 %v436
    %828 = vmatpush.bf16.msra.mxu0 %v432
    %829 = vmatpush.bf16.msra.mxu0 %v428
    %830 = vmatpush.bf16.msra.mxu0 %v424
    %831 = vmatpush.bf16.msra.mxu0 %v420
    %832 = vmatmul.bf16.gmra.mxu0 %v810
    %v833 = vpop.f32.mrf.mxu0
    %v834 = vadd.f32 0.0, %v833
    %v835 = vpop.f32.mrf.mxu0
    %836 = vdwg.mxu0
    %837 = vmatpush.bf16.msra.mxu0 %v449
    %838 = vmatpush.bf16.msra.mxu0 %v445
    %839 = vmatpush.bf16.msra.mxu0 %v441
    %840 = vmatpush.bf16.msra.mxu0 %v437
    %841 = vmatpush.bf16.msra.mxu0 %v433
    %842 = vmatpush.bf16.msra.mxu0 %v429
    %843 = vmatpush.bf16.msra.mxu0 %v425
    %844 = vmatpush.bf16.msra.mxu0 %v421
    %845 = vmatmul.bf16.gmra.mxu0 %v810
    %v846 = vpop.f32.mrf.mxu0
    %v847 = vadd.f32 0.0, %v846
    %v848 = vpop.f32.mrf.mxu0
    %849 = vdwg.mxu0
    %850 = vmatpush.bf16.msra.mxu0 %v450
    %851 = vmatpush.bf16.msra.mxu0 %v446
    %852 = vmatpush.bf16.msra.mxu0 %v442
    %853 = vmatpush.bf16.msra.mxu0 %v438
    %854 = vmatpush.bf16.msra.mxu0 %v434
    %855 = vmatpush.bf16.msra.mxu0 %v430
    %856 = vmatpush.bf16.msra.mxu0 %v426
    %857 = vmatpush.bf16.msra.mxu0 %v422
    %858 = vmatmul.bf16.gmra.mxu0 %v810
    %v859 = vpop.f32.mrf.mxu0
    %v860 = vadd.f32 0.0, %v859
    %v861 = vpop.f32.mrf.mxu0
    %862 = vdwg.mxu0
    %v863 = vadd.f32 %v806, %v821
    %v864 = vadd.f32 %v807, %v834
    %v865 = vadd.f32 %v808, %v847
    %v866 = vadd.f32 %v809, %v860
    %v867 = vmul.f32 %v863, 0.5
    %v868 = vtanh.pop %v867
    %v869 = vadd.f32 %v868, 1.0
    %v870 = vmul.f32 %v869, 0.5
    %v871 = vmul.f32 %v864, 0.5
    %v872 = vtanh.pop %v871
    %v873 = vadd.f32 %v872, 1.0
    %v874 = vmul.f32 %v873, 0.5
    %v875 = vtanh.pop %v865
    %v876 = vmul.f32 %v866, 0.5
    %v877 = vtanh.pop %v876
    %v878 = vadd.f32 %v877, 1.0
    %v879 = vmul.f32 %v878, 0.5
    %v880 = vmul.f32 %v874, %v800
    %v881 = vmul.f32 %v870, %v875
    %v882 = vadd.f32 %v880, %v881
    %v883 = vtanh.pop %v882
    %v884 = vmul.f32 %v879, %v883
    %s885 = smul.u32 5, 4
    %s886 = smul.addr %s885, 8
    %s887 = scalar_lea.vmem [#allocation2], %s886
    %v888 = vld [vmem:[%s887] sm:$0xff]
    %v889 = vld [vmem:[%s887 + $0x8] sm:$0xff]
    %v890 = vld [vmem:[%s887 + $0x10] sm:$0xff]
    %v891 = vld [vmem:[%s887 + $0x18] sm:$0xff]
    %v892 = vpack.c.bf16 %v884, %v884
    %893 = vmatpush.bf16.msra.mxu0 %v447
    %894 = vmatpush.bf16.msra.mxu0 %v443
    %895 = vmatpush.bf16.msra.mxu0 %v439
    %896 = vmatpush.bf16.msra.mxu0 %v435
    %897 = vmatpush.bf16.msra.mxu0 %v431
    %898 = vmatpush.bf16.msra.mxu0 %v427
    %899 = vmatpush.bf16.msra.mxu0 %v423
    %900 = vmatpush.bf16.msra.mxu0 %v419
    %901 = vmatmul.bf16.gmra.mxu0 %v892
    %v902 = vpop.f32.mrf.mxu0
    %v903 = vadd.f32 0.0, %v902
    %v904 = vpop.f32.mrf.mxu0
    %905 = vdwg.mxu0
    %906 = vmatpush.bf16.msra.mxu0 %v448
    %907 = vmatpush.bf16.msra.mxu0 %v444
    %908 = vmatpush.bf16.msra.mxu0 %v440
    %909 = vmatpush.bf16.msra.mxu0 %v436
    %910 = vmatpush.bf16.msra.mxu0 %v432
    %911 = vmatpush.bf16.msra.mxu0 %v428
    %912 = vmatpush.bf16.msra.mxu0 %v424
    %913 = vmatpush.bf16.msra.mxu0 %v420
    %914 = vmatmul.bf16.gmra.mxu0 %v892
    %v915 = vpop.f32.mrf.mxu0
    %v916 = vadd.f32 0.0, %v915
    %v917 = vpop.f32.mrf.mxu0
    %918 = vdwg.mxu0
    %919 = vmatpush.bf16.msra.mxu0 %v449
    %920 = vmatpush.bf16.msra.mxu0 %v445
    %921 = vmatpush.bf16.msra.mxu0 %v441
    %922 = vmatpush.bf16.msra.mxu0 %v437
    %923 = vmatpush.bf16.msra.mxu0 %v433
    %924 = vmatpush.bf16.msra.mxu0 %v429
    %925 = vmatpush.bf16.msra.mxu0 %v425
    %926 = vmatpush.bf16.msra.mxu0 %v421
    %927 = vmatmul.bf16.gmra.mxu0 %v892
    %v928 = vpop.f32.mrf.mxu0
    %v929 = vadd.f32 0.0, %v928
    %v930 = vpop.f32.mrf.mxu0
    %931 = vdwg.mxu0
    %932 = vmatpush.bf16.msra.mxu0 %v450
    %933 = vmatpush.bf16.msra.mxu0 %v446
    %934 = vmatpush.bf16.msra.mxu0 %v442
    %935 = vmatpush.bf16.msra.mxu0 %v438
    %936 = vmatpush.bf16.msra.mxu0 %v434
    %937 = vmatpush.bf16.msra.mxu0 %v430
    %938 = vmatpush.bf16.msra.mxu0 %v426
    %939 = vmatpush.bf16.msra.mxu0 %v422
    %940 = vmatmul.bf16.gmra.mxu0 %v892
    %v941 = vpop.f32.mrf.mxu0
    %v942 = vadd.f32 0.0, %v941
    %v943 = vpop.f32.mrf.mxu0
    %944 = vdwg.mxu0
    %v945 = vadd.f32 %v888, %v903
    %v946 = vadd.f32 %v889, %v916
    %v947 = vadd.f32 %v890, %v929
    %v948 = vadd.f32 %v891, %v942
    %v949 = vmul.f32 %v945, 0.5
    %v950 = vtanh.pop %v949
    %v951 = vadd.f32 %v950, 1.0
    %v952 = vmul.f32 %v951, 0.5
    %v953 = vmul.f32 %v946, 0.5
    %v954 = vtanh.pop %v953
    %v955 = vadd.f32 %v954, 1.0
    %v956 = vmul.f32 %v955, 0.5
    %v957 = vtanh.pop %v947
    %v958 = vmul.f32 %v948, 0.5
    %v959 = vtanh.pop %v958
    %v960 = vadd.f32 %v959, 1.0
    %v961 = vmul.f32 %v960, 0.5
    %v962 = vmul.f32 %v956, %v882
    %v963 = vmul.f32 %v952, %v957
    %v964 = vadd.f32 %v962, %v963
    %v965 = vtanh.pop %v964
    %v966 = vmul.f32 %v961, %v965
    %s967 = smul.u32 6, 4
    %s968 = smul.addr %s967, 8
    %s969 = scalar_lea.vmem [#allocation2], %s968
    %v970 = vld [vmem:[%s969] sm:$0xff]
    %v971 = vld [vmem:[%s969 + $0x8] sm:$0xff]
    %v972 = vld [vmem:[%s969 + $0x10] sm:$0xff]
    %v973 = vld [vmem:[%s969 + $0x18] sm:$0xff]
    %v974 = vpack.c.bf16 %v966, %v966
    %975 = vmatpush.bf16.msra.mxu0 %v447
    %976 = vmatpush.bf16.msra.mxu0 %v443
    %977 = vmatpush.bf16.msra.mxu0 %v439
    %978 = vmatpush.bf16.msra.mxu0 %v435
    %979 = vmatpush.bf16.msra.mxu0 %v431
    %980 = vmatpush.bf16.msra.mxu0 %v427
    %981 = vmatpush.bf16.msra.mxu0 %v423
    %982 = vmatpush.bf16.msra.mxu0 %v419
    %983 = vmatmul.bf16.gmra.mxu0 %v974
    %v984 = vpop.f32.mrf.mxu0
    %v985 = vadd.f32 0.0, %v984
    %v986 = vpop.f32.mrf.mxu0
    %987 = vdwg.mxu0
    %988 = vmatpush.bf16.msra.mxu0 %v448
    %989 = vmatpush.bf16.msra.mxu0 %v444
    %990 = vmatpush.bf16.msra.mxu0 %v440
    %991 = vmatpush.bf16.msra.mxu0 %v436
    %992 = vmatpush.bf16.msra.mxu0 %v432
    %993 = vmatpush.bf16.msra.mxu0 %v428
    %994 = vmatpush.bf16.msra.mxu0 %v424
    %995 = vmatpush.bf16.msra.mxu0 %v420
    %996 = vmatmul.bf16.gmra.mxu0 %v974
    %v997 = vpop.f32.mrf.mxu0
    %v998 = vadd.f32 0.0, %v997
    %v999 = vpop.f32.mrf.mxu0
    %1000 = vdwg.mxu0
    %1001 = vmatpush.bf16.msra.mxu0 %v449
    %1002 = vmatpush.bf16.msra.mxu0 %v445
    %1003 = vmatpush.bf16.msra.mxu0 %v441
    %1004 = vmatpush.bf16.msra.mxu0 %v437
    %1005 = vmatpush.bf16.msra.mxu0 %v433
    %1006 = vmatpush.bf16.msra.mxu0 %v429
    %1007 = vmatpush.bf16.msra.mxu0 %v425
    %1008 = vmatpush.bf16.msra.mxu0 %v421
    %1009 = vmatmul.bf16.gmra.mxu0 %v974
    %v1010 = vpop.f32.mrf.mxu0
    %v1011 = vadd.f32 0.0, %v1010
    %v1012 = vpop.f32.mrf.mxu0
    %1013 = vdwg.mxu0
    %1014 = vmatpush.bf16.msra.mxu0 %v450
    %1015 = vmatpush.bf16.msra.mxu0 %v446
    %1016 = vmatpush.bf16.msra.mxu0 %v442
    %1017 = vmatpush.bf16.msra.mxu0 %v438
    %1018 = vmatpush.bf16.msra.mxu0 %v434
    %1019 = vmatpush.bf16.msra.mxu0 %v430
    %1020 = vmatpush.bf16.msra.mxu0 %v426
    %1021 = vmatpush.bf16.msra.mxu0 %v422
    %1022 = vmatmul.bf16.gmra.mxu0 %v974
    %v1023 = vpop.f32.mrf.mxu0
    %v1024 = vadd.f32 0.0, %v1023
    %v1025 = vpop.f32.mrf.mxu0
    %1026 = vdwg.mxu0
    %v1027 = vadd.f32 %v970, %v985
    %v1028 = vadd.f32 %v971, %v998
    %v1029 = vadd.f32 %v972, %v1011
    %v1030 = vadd.f32 %v973, %v1024
    %v1031 = vmul.f32 %v1027, 0.5
    %v1032 = vtanh.pop %v1031
    %v1033 = vadd.f32 %v1032, 1.0
    %v1034 = vmul.f32 %v1033, 0.5
    %v1035 = vmul.f32 %v1028, 0.5
    %v1036 = vtanh.pop %v1035
    %v1037 = vadd.f32 %v1036, 1.0
    %v1038 = vmul.f32 %v1037, 0.5
    %v1039 = vtanh.pop %v1029
    %v1040 = vmul.f32 %v1030, 0.5
    %v1041 = vtanh.pop %v1040
    %v1042 = vadd.f32 %v1041, 1.0
    %v1043 = vmul.f32 %v1042, 0.5
    %v1044 = vmul.f32 %v1038, %v964
    %v1045 = vmul.f32 %v1034, %v1039
    %v1046 = vadd.f32 %v1044, %v1045
    %v1047 = vtanh.pop %v1046
    %v1048 = vmul.f32 %v1043, %v1047
    %s1049 = smul.u32 7, 4
    %s1050 = smul.addr %s1049, 8
    %s1051 = scalar_lea.vmem [#allocation2], %s1050
    %v1052 = vld [vmem:[%s1051] sm:$0xff]
    %v1053 = vld [vmem:[%s1051 + $0x8] sm:$0xff]
    %v1054 = vld [vmem:[%s1051 + $0x10] sm:$0xff]
    %v1055 = vld [vmem:[%s1051 + $0x18] sm:$0xff]
    %v1056 = vpack.c.bf16 %v1048, %v1048
    %1057 = vmatpush.bf16.msra.mxu0 %v447
    %1058 = vmatpush.bf16.msra.mxu0 %v443
    %1059 = vmatpush.bf16.msra.mxu0 %v439
    %1060 = vmatpush.bf16.msra.mxu0 %v435
    %1061 = vmatpush.bf16.msra.mxu0 %v431
    %1062 = vmatpush.bf16.msra.mxu0 %v427
    %1063 = vmatpush.bf16.msra.mxu0 %v423
    %1064 = vmatpush.bf16.msra.mxu0 %v419
    %1065 = vmatmul.bf16.gmra.mxu0 %v1056
    %v1066 = vpop.f32.mrf.mxu0
    %v1067 = vadd.f32 0.0, %v1066
    %v1068 = vpop.f32.mrf.mxu0
    %1069 = vdwg.mxu0
    %1070 = vmatpush.bf16.msra.mxu0 %v448
    %1071 = vmatpush.bf16.msra.mxu0 %v444
    %1072 = vmatpush.bf16.msra.mxu0 %v440
    %1073 = vmatpush.bf16.msra.mxu0 %v436
    %1074 = vmatpush.bf16.msra.mxu0 %v432
    %1075 = vmatpush.bf16.msra.mxu0 %v428
    %1076 = vmatpush.bf16.msra.mxu0 %v424
    %1077 = vmatpush.bf16.msra.mxu0 %v420
    %1078 = vmatmul.bf16.gmra.mxu0 %v1056
    %v1079 = vpop.f32.mrf.mxu0
    %v1080 = vadd.f32 0.0, %v1079
    %v1081 = vpop.f32.mrf.mxu0
    %1082 = vdwg.mxu0
    %1083 = vmatpush.bf16.msra.mxu0 %v449
    %1084 = vmatpush.bf16.msra.mxu0 %v445
    %1085 = vmatpush.bf16.msra.mxu0 %v441
    %1086 = vmatpush.bf16.msra.mxu0 %v437
    %1087 = vmatpush.bf16.msra.mxu0 %v433
    %1088 = vmatpush.bf16.msra.mxu0 %v429
    %1089 = vmatpush.bf16.msra.mxu0 %v425
    %1090 = vmatpush.bf16.msra.mxu0 %v421
    %1091 = vmatmul.bf16.gmra.mxu0 %v1056
    %v1092 = vpop.f32.mrf.mxu0
    %v1093 = vadd.f32 0.0, %v1092
    %v1094 = vpop.f32.mrf.mxu0
    %1095 = vdwg.mxu0
    %1096 = vmatpush.bf16.msra.mxu0 %v450
    %1097 = vmatpush.bf16.msra.mxu0 %v446
    %1098 = vmatpush.bf16.msra.mxu0 %v442
    %1099 = vmatpush.bf16.msra.mxu0 %v438
    %1100 = vmatpush.bf16.msra.mxu0 %v434
    %1101 = vmatpush.bf16.msra.mxu0 %v430
    %1102 = vmatpush.bf16.msra.mxu0 %v426
    %1103 = vmatpush.bf16.msra.mxu0 %v422
    %1104 = vmatmul.bf16.gmra.mxu0 %v1056
    %v1105 = vpop.f32.mrf.mxu0
    %v1106 = vadd.f32 0.0, %v1105
    %v1107 = vpop.f32.mrf.mxu0
    %1108 = vdwg.mxu0
    %v1109 = vadd.f32 %v1052, %v1067
    %v1110 = vadd.f32 %v1053, %v1080
    %v1111 = vadd.f32 %v1054, %v1093
    %v1112 = vadd.f32 %v1055, %v1106
    %v1113 = vmul.f32 %v1109, 0.5
    %v1114 = vtanh.pop %v1113
    %v1115 = vadd.f32 %v1114, 1.0
    %v1116 = vmul.f32 %v1115, 0.5
    %v1117 = vmul.f32 %v1110, 0.5
    %v1118 = vtanh.pop %v1117
    %v1119 = vadd.f32 %v1118, 1.0
    %v1120 = vmul.f32 %v1119, 0.5
    %v1121 = vtanh.pop %v1111
    %v1122 = vmul.f32 %v1112, 0.5
    %v1123 = vtanh.pop %v1122
    %v1124 = vadd.f32 %v1123, 1.0
    %v1125 = vmul.f32 %v1124, 0.5
    %v1126 = vmul.f32 %v1120, %v1046
    %v1127 = vmul.f32 %v1116, %v1121
    %v1128 = vadd.f32 %v1126, %v1127
    %v1129 = vtanh.pop %v1128
    %v1130 = vmul.f32 %v1125, %v1129
    %v1131 = vpack.c.bf16 %v1130, %v1130
    %v1132 = vld [vmem:[#allocation5] sm:$0xff]
    %v1133 = vld [vmem:[#allocation5 + $0x8] sm:$0xff]
    %v1134 = vld [vmem:[#allocation5 + $0x10] sm:$0xff]
    %v1135 = vld [vmem:[#allocation5 + $0x18] sm:$0xff]
    %v1136 = vld [vmem:[#allocation5 + $0x20] sm:$0xff]
    %v1137 = vld [vmem:[#allocation5 + $0x28] sm:$0xff]
    %v1138 = vld [vmem:[#allocation5 + $0x30] sm:$0xff]
    %v1139 = vld [vmem:[#allocation5 + $0x38] sm:$0xff]
    %v1140 = vld [vmem:[#allocation5 + $0x40] sm:$0xff]
    %v1141 = vld [vmem:[#allocation5 + $0x48] sm:$0xff]
    %v1142 = vld [vmem:[#allocation5 + $0x50] sm:$0xff]
    %v1143 = vld [vmem:[#allocation5 + $0x58] sm:$0xff]
    %v1144 = vld [vmem:[#allocation5 + $0x60] sm:$0xff]
    %v1145 = vld [vmem:[#allocation5 + $0x68] sm:$0xff]
    %v1146 = vld [vmem:[#allocation5 + $0x70] sm:$0xff]
    %v1147 = vld [vmem:[#allocation5 + $0x78] sm:$0xff]
    %v1148 = vld [vmem:[%s5] sm:$0x3]
    %v1150 = vperm.slane %v1148, 0
    %v1151 = vperm.slane %v1148, 1
    %v1170 = vunpack.c.l.b16 %v1132
    %v1171 = vunpack.c.h.b16 %v1132
    %v1172 = vunpack.c.l.b16 %v1133
    %v1173 = vunpack.c.h.b16 %v1133
    %v1174 = vunpack.c.l.b16 %v1134
    %v1175 = vunpack.c.h.b16 %v1134
    %v1176 = vunpack.c.l.b16 %v1135
    %v1177 = vunpack.c.h.b16 %v1135
    %v1178 = vunpack.c.l.b16 %v1136
    %v1179 = vunpack.c.h.b16 %v1136
    %v1180 = vunpack.c.l.b16 %v1137
    %v1181 = vunpack.c.h.b16 %v1137
    %v1182 = vunpack.c.l.b16 %v1138
    %v1183 = vunpack.c.h.b16 %v1138
    %v1184 = vunpack.c.l.b16 %v1139
    %v1185 = vunpack.c.h.b16 %v1139
    %v1186 = vunpack.c.l.b16 %v1140
    %v1187 = vunpack.c.h.b16 %v1140
    %v1188 = vunpack.c.l.b16 %v1141
    %v1189 = vunpack.c.h.b16 %v1141
    %v1190 = vunpack.c.l.b16 %v1142
    %v1191 = vunpack.c.h.b16 %v1142
    %v1192 = vunpack.c.l.b16 %v1143
    %v1193 = vunpack.c.h.b16 %v1143
    %v1194 = vunpack.c.l.b16 %v1144
    %v1195 = vunpack.c.h.b16 %v1144
    %v1196 = vunpack.c.l.b16 %v1145
    %v1197 = vunpack.c.h.b16 %v1145
    %v1198 = vunpack.c.l.b16 %v1146
    %v1199 = vunpack.c.h.b16 %v1146
    %v1200 = vunpack.c.l.b16 %v1147
    %v1201 = vunpack.c.h.b16 %v1147
    %v1202 = vpack.c.b16 %v1172, %v1170
    %v1203 = vpack.c.b16 %v1173, %v1171
    %v1204 = vpack.c.b16 %v1176, %v1174
    %v1205 = vpack.c.b16 %v1177, %v1175
    %v1206 = vpack.c.b16 %v1180, %v1178
    %v1207 = vpack.c.b16 %v1181, %v1179
    %v1208 = vpack.c.b16 %v1184, %v1182
    %v1209 = vpack.c.b16 %v1185, %v1183
    %v1210 = vpack.c.b16 %v1188, %v1186
    %v1211 = vpack.c.b16 %v1189, %v1187
    %v1212 = vpack.c.b16 %v1192, %v1190
    %v1213 = vpack.c.b16 %v1193, %v1191
    %v1214 = vpack.c.b16 %v1196, %v1194
    %v1215 = vpack.c.b16 %v1197, %v1195
    %v1216 = vpack.c.b16 %v1200, %v1198
    %v1217 = vpack.c.b16 %v1201, %v1199
    %1234 = vmatpush.bf16.msra.mxu0 %v1216
    %1235 = vmatpush.bf16.msra.mxu0 %v1214
    %1236 = vmatpush.bf16.msra.mxu0 %v1212
    %1237 = vmatpush.bf16.msra.mxu0 %v1210
    %1238 = vmatpush.bf16.msra.mxu0 %v1208
    %1239 = vmatpush.bf16.msra.mxu0 %v1206
    %1240 = vmatpush.bf16.msra.mxu0 %v1204
    %1241 = vmatpush.bf16.msra.mxu0 %v1202
    %1242 = vmatmul.bf16.gmra.mxu0 %v1131
    %v1243 = vpop.f32.mrf.mxu0
    %v1244 = vadd.f32 %v1150, %v1243
    %v1245 = vpop.f32.mrf.mxu0
    %1246 = vdwg.mxu0
    %1247 = vmatpush.bf16.msra.mxu0 %v1217
    %1248 = vmatpush.bf16.msra.mxu0 %v1215
    %1249 = vmatpush.bf16.msra.mxu0 %v1213
    %1250 = vmatpush.bf16.msra.mxu0 %v1211
    %1251 = vmatpush.bf16.msra.mxu0 %v1209
    %1252 = vmatpush.bf16.msra.mxu0 %v1207
    %1253 = vmatpush.bf16.msra.mxu0 %v1205
    %1254 = vmatpush.bf16.msra.mxu0 %v1203
    %1255 = vmatmul.bf16.gmra.mxu0 %v1131
    %v1256 = vpop.f32.mrf.mxu0
    %v1257 = vadd.f32 %v1151, %v1256
    %v1258 = vpop.f32.mrf.mxu0
    %1259 = vdwg.mxu0
    %v1260 = vmax.f32 %v1244, 0.0
    %v1261 = vmax.f32 %v1257, 0.0
    %v1262 = vpack.c.bf16 %v1260, %v1260
    %v1263 = vpack.c.bf16 %v1261, %v1261
    %v1264 = vld [vmem:[#allocation7] sm:$0xf]
    %v1265 = vld [vmem:[#allocation7 + $0x4] sm:$0xf]
    %v1266 = vld [vmem:[#allocation7 + $0x8] sm:$0xf]
    %v1267 = vld [vmem:[#allocation7 + $0xc] sm:$0xf]
    %v1268 = vld [vmem:[#allocation7 + $0x10] sm:$0xf]
    %v1269 = vld [vmem:[#allocation7 + $0x14] sm:$0xf]
    %v1270 = vld [vmem:[#allocation7 + $0x18] sm:$0xf]
    %v1271 = vld [vmem:[#allocation7 + $0x1c] sm:$0xf]
    %v1272 = vld [vmem:[#allocation7 + $0x20] sm:$0xf]
    %v1273 = vld [vmem:[#allocation7 + $0x24] sm:$0xf]
    %v1274 = vld [vmem:[#allocation7 + $0x28] sm:$0xf]
    %v1275 = vld [vmem:[#allocation7 + $0x2c] sm:$0xf]
    %v1276 = vld [vmem:[#allocation7 + $0x30] sm:$0xf]
    %v1277 = vld [vmem:[#allocation7 + $0x34] sm:$0xf]
    %v1278 = vld [vmem:[#allocation7 + $0x38] sm:$0xf]
    %v1279 = vld [vmem:[#allocation7 + $0x3c] sm:$0xf]
    %v1280 = vld [vmem:[#allocation7 + $0x40] sm:$0xf]
    %v1281 = vld [vmem:[#allocation7 + $0x44] sm:$0xf]
    %v1282 = vld [vmem:[#allocation7 + $0x48] sm:$0xf]
    %v1283 = vld [vmem:[#allocation7 + $0x4c] sm:$0xf]
    %v1284 = vld [vmem:[#allocation7 + $0x50] sm:$0xf]
    %v1285 = vld [vmem:[#allocation7 + $0x54] sm:$0xf]
    %v1286 = vld [vmem:[#allocation7 + $0x58] sm:$0xf]
    %v1287 = vld [vmem:[#allocation7 + $0x5c] sm:$0xf]
    %v1288 = vld [vmem:[#allocation7 + $0x60] sm:$0xf]
    %v1289 = vld [vmem:[#allocation7 + $0x64] sm:$0xf]
    %v1290 = vld [vmem:[#allocation7 + $0x68] sm:$0xf]
    %v1291 = vld [vmem:[#allocation7 + $0x6c] sm:$0xf]
    %v1292 = vld [vmem:[#allocation7 + $0x70] sm:$0xf]
    %v1293 = vld [vmem:[#allocation7 + $0x74] sm:$0xf]
    %v1294 = vld [vmem:[#allocation7 + $0x78] sm:$0xf]
    %v1295 = vld [vmem:[#allocation7 + $0x7c] sm:$0xf]
    %v1296 = vld [vmem:[%s7] sm:$0x1]
    %v1298 = vperm.slane %v1296, 0
    %v1332 = vunpack.c.l.b16 %v1264
    %v1333 = vunpack.c.l.b16 %v1265
    %v1334 = vunpack.c.l.b16 %v1266
    %v1335 = vunpack.c.l.b16 %v1267
    %v1336 = vunpack.c.l.b16 %v1268
    %v1337 = vunpack.c.l.b16 %v1269
    %v1338 = vunpack.c.l.b16 %v1270
    %v1339 = vunpack.c.l.b16 %v1271
    %v1340 = vunpack.c.l.b16 %v1272
    %v1341 = vunpack.c.l.b16 %v1273
    %v1342 = vunpack.c.l.b16 %v1274
    %v1343 = vunpack.c.l.b16 %v1275
    %v1344 = vunpack.c.l.b16 %v1276
    %v1345 = vunpack.c.l.b16 %v1277
    %v1346 = vunpack.c.l.b16 %v1278
    %v1347 = vunpack.c.l.b16 %v1279
    %v1348 = vunpack.c.l.b16 %v1280
    %v1349 = vunpack.c.l.b16 %v1281
    %v1350 = vunpack.c.l.b16 %v1282
    %v1351 = vunpack.c.l.b16 %v1283
    %v1352 = vunpack.c.l.b16 %v1284
    %v1353 = vunpack.c.l.b16 %v1285
    %v1354 = vunpack.c.l.b16 %v1286
    %v1355 = vunpack.c.l.b16 %v1287
    %v1356 = vunpack.c.l.b16 %v1288
    %v1357 = vunpack.c.l.b16 %v1289
    %v1358 = vunpack.c.l.b16 %v1290
    %v1359 = vunpack.c.l.b16 %v1291
    %v1360 = vunpack.c.l.b16 %v1292
    %v1361 = vunpack.c.l.b16 %v1293
    %v1362 = vunpack.c.l.b16 %v1294
    %v1363 = vunpack.c.l.b16 %v1295
    %v1364 = vpack.c.b16 %v1333, %v1332
    %v1365 = vpack.c.b16 %v1335, %v1334
    %v1366 = vpack.c.b16 %v1337, %v1336
    %v1367 = vpack.c.b16 %v1339, %v1338
    %v1368 = vpack.c.b16 %v1341, %v1340
    %v1369 = vpack.c.b16 %v1343, %v1342
    %v1370 = vpack.c.b16 %v1345, %v1344
    %v1371 = vpack.c.b16 %v1347, %v1346
    %v1372 = vpack.c.b16 %v1349, %v1348
    %v1373 = vpack.c.b16 %v1351, %v1350
    %v1374 = vpack.c.b16 %v1353, %v1352
    %v1375 = vpack.c.b16 %v1355, %v1354
    %v1376 = vpack.c.b16 %v1357, %v1356
    %v1377 = vpack.c.b16 %v1359, %v1358
    %v1378 = vpack.c.b16 %v1361, %v1360
    %v1379 = vpack.c.b16 %v1363, %v1362
    %1396 = vmatpush.bf16.msra.mxu0 %v1371
    %1397 = vmatpush.bf16.msra.mxu0 %v1370
    %1398 = vmatpush.bf16.msra.mxu0 %v1369
    %1399 = vmatpush.bf16.msra.mxu0 %v1368
    %1400 = vmatpush.bf16.msra.mxu0 %v1367
    %1401 = vmatpush.bf16.msra.mxu0 %v1366
    %1402 = vmatpush.bf16.msra.mxu0 %v1365
    %1403 = vmatpush.bf16.msra.mxu0 %v1364
    %1404 = vmatmul.bf16.gmra.mxu0 %v1262
    %v1405 = vpop.f32.mrf.mxu0
    %v1406 = vadd.f32 %v1298, %v1405
    %v1407 = vpop.f32.mrf.mxu0
    %1408 = vdwg.mxu0
    %1409 = vmatpush.bf16.msra.mxu0 %v1379
    %1410 = vmatpush.bf16.msra.mxu0 %v1378
    %1411 = vmatpush.bf16.msra.mxu0 %v1377
    %1412 = vmatpush.bf16.msra.mxu0 %v1376
    %1413 = vmatpush.bf16.msra.mxu0 %v1375
    %1414 = vmatpush.bf16.msra.mxu0 %v1374
    %1415 = vmatpush.bf16.msra.mxu0 %v1373
    %1416 = vmatpush.bf16.msra.mxu0 %v1372
    %1417 = vmatmul.bf16.gmra.mxu0 %v1263
    %v1418 = vpop.f32.mrf.mxu0
    %v1419 = vadd.f32 %v1406, %v1418
    %v1420 = vpop.f32.mrf.mxu0
    %1421 = vdwg.mxu0
    %v1422 = vlaneseq
    %v1423 = vand.u32 %v1422, 127
    %vm1424 = vcmp.lt.s32.totalorder %v1423, 6
    %vm1425 = vcmp.eq.s32.totalorder %v1423, 6
    %v1426 = vsel %vm1424, %v1419, 0.0
    %1427 = vadd.xlane.f32.xlu0 %v1426
    %v1428 = vpop.xlane.xlu0 %1427
    %v1429 = vmul.f32 %v1428, 0.16666667
    %v1430 = vsel %vm1425, %v1419, 0.0
    %1431 = vadd.xlane.f32.xlu0 %v1430
    %v1432 = vpop.xlane.xlu0 %1431
    %v1433 = vadd.f32 %v1419, %v1432
    %v1434 = vsub.f32 %v1433, %v1429
    %v1435 = vsel %vm1424, %v1434, 0.0
    %1436 = vst [vmem:[%s8] sm:$0xff] %v1435
    // Predicated region
    $region46: #{duel_ddnq_forward.1} parent=1 // pred_check
      _
    $region47: #{duel_ddnq_forward.1} parent=1 // pred_check_branch
      %1438 = sbr.rel (0) target = $region49
    $region48: #{duel_ddnq_forward.1} parent=1 // pred_region
      _
    $region49: #{duel_ddnq_forward.1} parent=1 // pred_fallthru
      _
    // Predicated region
    $region50: #{duel_ddnq_forward.1} parent=1 // pred_check
      _
    $region51: #{duel_ddnq_forward.1} parent=1 // pred_check_branch
      %1440 = sbr.rel (0) target = $region53
    $region52: #{duel_ddnq_forward.1} parent=1 // pred_region
      _
    $region53: #{duel_ddnq_forward.1} parent=1 // pred_fallthru
      _
    %1441 = vsyncpa [#allocation4], 1
    %1442 = vsyncpa [#allocation6], 1

</llo_original>
